<compile_context>
chip_gen: v6e
topology: v6e:2x2x1
jax: 0.10.0
libtpu: 0.0.40
codegen_flags: <defaults>
</compile_context>

<pallas_src>
import jax
import jax.numpy as jnp
from jax.experimental import pallas as pl
from jax.experimental.pallas import tpu as pltpu

_NEG = -1e30  # finite "-inf" sentinel (avoids inf-inf NaNs); safe in f32


# --------------------------------------------------------------------------- #
# Fused fast path: whole bag resident in VMEM, single kernel launch.
# --------------------------------------------------------------------------- #
def _fused_kernel(n_ref, x_ref, w_ref, b_ref, ctx_ref, outc_ref, alpha_ref):
    n_valid = n_ref[0]                                                 # SMEM scalar
    x = x_ref[...]                                                     # [Np, D]

    # classifier projection (weights pre-transposed to [D, K] in the wrapper)
    out_c = jnp.dot(x, w_ref[...], preferred_element_type=jnp.float32) + b_ref[...]
    outc_ref[...] = out_c                                              # [Np, K]

    n_pad = x_ref.shape[0]
    rows = jax.lax.broadcasted_iota(jnp.int32, (n_pad, 1), 0)
    valid = rows < n_valid

    # per-row logsumexp over classes (the reference's global max cancels in
    # the alpha ratio, so per-row stabilization is equivalent and safe)
    row_max = jnp.max(out_c, axis=1, keepdims=True)                    # [Np, 1]
    row_sum = jnp.sum(jnp.exp(out_c - row_max), axis=1, keepdims=True)
    lse = row_max + jnp.log(row_sum)                                   # [Np, 1]
    lse = jnp.where(valid, lse, _NEG)

    # global softmax over instances
    g_max = jnp.max(lse, axis=0, keepdims=True)                        # (1, 1)
    e = jnp.where(valid, jnp.exp(lse - g_max), 0.0)                    # [Np, 1]
    denom = jnp.sum(e, axis=0, keepdims=True)                          # (1, 1)
    inv = pl.reciprocal(denom, approx=True)                            # EUP slot
    inv = inv * (2.0 - denom * inv)                                    # 1 Newton step -> f32-accurate
    alpha = e * inv                                                    # [Np, 1]
    alpha_ref[...] = alpha

    nf = n_valid.astype(jnp.float32)
    ctx_ref[...] = x * (alpha * nf)                                    # [Np, D] lane-dense store


# --------------------------------------------------------------------------- #
# Tiled path (large bags): two fully "parallel" streaming kernels.
# --------------------------------------------------------------------------- #
def _proj_kernel(x_ref, w_ref, b_ref, outc_ref):
    outc_ref[...] = (jnp.dot(x_ref[...], w_ref[...],
                             preferred_element_type=jnp.float32) + b_ref[...])


def _context_kernel(x_ref, a_ref, ctx_ref):
    # a_ref holds N * alpha precomputed in the wrapper; context is lane-dense.
    ctx_ref[...] = x_ref[...] * a_ref[...]


# --------------------------------------------------------------------------- #
# Wrapper
# --------------------------------------------------------------------------- #
def attention_layer_forward(features, w1, b1, flag=1, *, tile_n=512,
                            fused_bytes_limit=4 * 1024 * 1024):
    """features: [N, D], w1: [K, D], b1: [K] -> (context [N, D], out_c [N, K], alpha [N])."""
    features = jnp.asarray(features, jnp.float32)
    n, d = features.shape
    k = w1.shape[0]

    if flag != 1:
        # TODO(synk): the reference's flag != 1 branch returns `out_c` without
        # defining it (a NameError in PyTorch); we return zeros for out_c.
        alpha = jnp.zeros((n, 1), jnp.float32)
        return features, jnp.zeros((n, k), jnp.float32), jnp.squeeze(alpha)

    if n == 0:
        return features, jnp.zeros((0, k), jnp.float32), jnp.zeros((0,), jnp.float32)

    w = jnp.asarray(w1, jnp.float32).T.reshape(d, k)   # [D, K]: kernel does x @ W (no in-kernel .T)
    b = jnp.asarray(b1, jnp.float32).reshape(1, k)

    # ---------------- fused fast path: whole bag resident in VMEM -------------
    n_pad8 = ((n + 7) // 8) * 8
    if n_pad8 * d * 4 <= fused_bytes_limit:
        x_p = features if n_pad8 == n else jnp.pad(features, ((0, n_pad8 - n), (0, 0)))
        n_arr = jnp.array([n], jnp.int32)   # scalar prefetch: no recompile per bag size
        ctx_p, outc_p, alpha_p = pl.pallas_call(
            _fused_kernel,
            grid_spec=pltpu.PrefetchScalarGridSpec(
                num_scalar_prefetch=1,
                grid=(1,),
                in_specs=[
                    pl.BlockSpec((n_pad8, d), lambda i, n_s: (0, 0)),
                    pl.BlockSpec((d, k), lambda i, n_s: (0, 0)),
                    pl.BlockSpec((1, k), lambda i, n_s: (0, 0)),
                ],
                out_specs=(
                    pl.BlockSpec((n_pad8, d), lambda i, n_s: (0, 0)),
                    pl.BlockSpec((n_pad8, k), lambda i, n_s: (0, 0)),
                    pl.BlockSpec((n_pad8, 1), lambda i, n_s: (0, 0)),
                ),
            ),
            out_shape=(
                jax.ShapeDtypeStruct((n_pad8, d), jnp.float32),
                jax.ShapeDtypeStruct((n_pad8, k), jnp.float32),
                jax.ShapeDtypeStruct((n_pad8, 1), jnp.float32),
            ),
            compiler_params=pltpu.CompilerParams(
                dimension_semantics=("arbitrary",),
                vmem_limit_bytes=32 * 1024 * 1024,   # safe on v5e/v6e/v7x
            ),
        )(n_arr, x_p, w, b)
        return ctx_p[:n], outc_p[:n], jnp.squeeze(alpha_p[:n])

    # ---------------- tiled path for large bags --------------------------------
    # Cap tile_n so double-buffered x + context tiles stay ~<= 12 MiB (v7x/v5e safe).
    cap = max(8, ((12 * 1024 * 1024) // (16 * d)) // 8 * 8)
    tn = max(8, (min(tile_n, cap) // 8) * 8)
    n_tiles = pl.cdiv(n, tn)
    n_pad = n_tiles * tn
    x_p = features if n_pad == n else jnp.pad(features, ((0, n_pad - n), (0, 0)))

    # Pass 1: projection only; fully parallel grid (shards across TensorCores).
    outc_p = pl.pallas_call(
        _proj_kernel,
        grid=(n_tiles,),
        in_specs=[
            pl.BlockSpec((tn, d), lambda t: (t, 0)),
            pl.BlockSpec((d, k), lambda t: (0, 0)),
            pl.BlockSpec((1, k), lambda t: (0, 0)),
        ],
        out_specs=pl.BlockSpec((tn, k), lambda t: (t, 0)),
        out_shape=jax.ShapeDtypeStruct((n_pad, k), jnp.float32),
        compiler_params=pltpu.CompilerParams(
            dimension_semantics=("parallel",),
            vmem_limit_bytes=32 * 1024 * 1024,
        ),
    )(x_p, w, b)

    # Global softmax over instances: [N, K] is tiny, keep it in XLA so the
    # Pallas grids need no cross-step accumulators (stay "parallel").
    out_c = outc_p[:n]
    shifted = jnp.exp(out_c - jnp.max(out_c))
    row_sum = shifted.sum(axis=1, keepdims=True)             # [N, 1]
    alpha = row_sum / row_sum.sum(axis=0)                    # [N, 1]
    alpha_scaled = alpha * jnp.float32(n)                    # fold N into the multiplier
    alpha_scaled_p = jnp.pad(alpha_scaled, ((0, n_pad - n), (0, 0)))

    # Pass 2: context = features * (N * alpha); lane-dense [tn, D] stores.
    ctx_p = pl.pallas_call(
        _context_kernel,
        grid=(n_tiles,),
        in_specs=[
            pl.BlockSpec((tn, d), lambda t: (t, 0)),
            pl.BlockSpec((tn, 1), lambda t: (t, 0)),
        ],
        out_specs=pl.BlockSpec((tn, d), lambda t: (t, 0)),
        out_shape=jax.ShapeDtypeStruct((n_pad, d), jnp.float32),
        compiler_params=pltpu.CompilerParams(
            dimension_semantics=("parallel",),
            vmem_limit_bytes=32 * 1024 * 1024,
        ),
    )(x_p, alpha_scaled_p)

    return ctx_p[:n], out_c, jnp.squeeze(alpha)


def attention_layer_reference(features, w1, b1, flag=1):
    """Plain-JAX mirror of the PyTorch semantics (flag == 1 path)."""
    features = jnp.asarray(features, jnp.float32)
    if flag == 1:
        out_c = features @ jnp.asarray(w1, jnp.float32).T + jnp.asarray(b1, jnp.float32)
        out = jnp.exp(out_c - jnp.max(out_c))
        out = out.sum(axis=1, keepdims=True)
        alpha = out / out.sum(axis=0)
        context = features * (features.shape[0] * alpha)
        return context, out_c, jnp.squeeze(alpha)
    alpha = jnp.zeros((features.shape[0], 1), jnp.float32)
    return features, jnp.zeros((features.shape[0], w1.shape[0]), jnp.float32), jnp.squeeze(alpha)


if __name__ == "__main__":
    # Small shapes consistent with the module: N instances x D features,
    # classifier weight W_1 [K, D].  N deliberately not a multiple of 8/512 to
    # exercise the ragged-tail masking / padding in both code paths.
    N, D, K = 500, 256, 4

    key = jax.random.PRNGKey(0)
    kx, kw, kb = jax.random.split(key, 3)
    features = jax.random.normal(kx, (N, D), jnp.float32)
    w1 = jax.random.normal(kw, (K, D), jnp.float32) * 0.05
    b1 = jax.random.normal(kb, (K,), jnp.float32) * 0.05

    # Fused fast path (whole bag in VMEM) ...
    ctx_f, outc_f, alpha_f = attention_layer_forward(features, w1, b1, flag=1)
    # ... and the tiled large-bag path, forced by disabling the fused threshold.
    ctx_t, outc_t, alpha_t = attention_layer_forward(features, w1, b1, flag=1,
                                                     fused_bytes_limit=0)
    jax.block_until_ready((ctx_f, outc_f, alpha_f, ctx_t, outc_t, alpha_t))

    r_ctx, r_outc, r_alpha = attention_layer_reference(features, w1, b1, flag=1)
    for name, (c, oc, a) in (("fused", (ctx_f, outc_f, alpha_f)),
                             ("tiled", (ctx_t, outc_t, alpha_t))):
        assert c.shape == (N, D) and oc.shape == (N, K) and a.shape == (N,), name
        assert jnp.allclose(oc, r_outc, rtol=1e-4, atol=1e-5), f"{name} out_c mismatch"
        assert jnp.allclose(a, r_alpha, rtol=2e-3, atol=1e-7), f"{name} alpha mismatch"
        assert jnp.allclose(c, r_ctx, rtol=2e-3, atol=1e-4), f"{name} context mismatch"

    print("KERNEL_OK")
</pallas_src>

<mosaic_0001>
module attributes {stable_mosaic.version = 11 : i64} {
  func.func @_fused_kernel(%arg0: i32, %arg1: memref<1xi32, #tpu.memory_space<smem>>, %arg2: memref<504x256xf32, #tpu.memory_space<vmem>>, %arg3: memref<256x4xf32, #tpu.memory_space<vmem>>, %arg4: memref<1x4xf32, #tpu.memory_space<vmem>>, %arg5: memref<504x256xf32, #tpu.memory_space<vmem>>, %arg6: memref<504x4xf32, #tpu.memory_space<vmem>>, %arg7: memref<504x1xf32, #tpu.memory_space<vmem>>) attributes {dimension_semantics = [#tpu.dimension_semantics<arbitrary>], iteration_bounds = array<i64: 1>, scalar_prefetch = 1 : i64, scratch_operands = 0 : i64, tpu.core_type = #tpu.core_type<tc>, window_params = [{pipeline_mode = #tpu.pipeline_mode<synchronous>, transform_indices = @transform_0, window_bounds = array<i64: 504, 256>}, {pipeline_mode = #tpu.pipeline_mode<synchronous>, transform_indices = @transform_1, window_bounds = array<i64: 256, 4>}, {pipeline_mode = #tpu.pipeline_mode<synchronous>, transform_indices = @transform_2, window_bounds = array<i64: 1, 4>}, {pipeline_mode = #tpu.pipeline_mode<synchronous>, transform_indices = @transform_3, window_bounds = array<i64: 504, 256>}, {pipeline_mode = #tpu.pipeline_mode<synchronous>, transform_indices = @transform_4, window_bounds = array<i64: 504, 4>}, {pipeline_mode = #tpu.pipeline_mode<synchronous>, transform_indices = @transform_5, window_bounds = array<i64: 504, 1>}]} {
    %c0 = arith.constant 0 : index
    %0 = memref.load %arg1[%c0] : memref<1xi32, #tpu.memory_space<smem>>
    %c0_0 = arith.constant 0 : index
    %c0_1 = arith.constant 0 : index
    %1 = vector.load %arg2[%c0_0, %c0_1] : memref<504x256xf32, #tpu.memory_space<vmem>>, vector<504x256xf32>
    %c0_2 = arith.constant 0 : index
    %c0_3 = arith.constant 0 : index
    %2 = vector.load %arg3[%c0_2, %c0_3] : memref<256x4xf32, #tpu.memory_space<vmem>>, vector<256x4xf32>
    %cst = arith.constant dense<0.000000e+00> : vector<504x4xf32>
    %3 = tpu.matmul %1, %2, %cst {dimension_numbers = #tpu.dot_dimension_numbers<[1], [0], [0], [1], [0, 0, 1, 1], [], []>} : vector<504x256xf32>, vector<256x4xf32>, vector<504x4xf32> -> vector<504x4xf32>
    %c0_4 = arith.constant 0 : index
    %c0_5 = arith.constant 0 : index
    %4 = vector.load %arg4[%c0_4, %c0_5] : memref<1x4xf32, #tpu.memory_space<vmem>>, vector<1x4xf32>
    %5 = vector.broadcast %4 : vector<1x4xf32> to vector<504x4xf32>
    %6 = arith.addf %3, %5 : vector<504x4xf32>
    %c0_6 = arith.constant 0 : index
    %c0_7 = arith.constant 0 : index
    %7 = vector.load %arg6[%c0_6, %c0_7] : memref<504x4xf32, #tpu.memory_space<vmem>>, vector<504x4xf32>
    tpu.vector_store %arg6[%c0_6, %c0_7], %6 {strides = array<i32>} : memref<504x4xf32, #tpu.memory_space<vmem>>, vector<504x4xf32>,
    %8 = tpu.iota {dimensions = array<i32: 0>} : vector<504x1xi32>
    %9 = vector.broadcast %0 : i32 to vector<504x1xi32>
    %10 = arith.cmpi slt, %8, %9 : vector<504x1xi32>
    %cst_8 = arith.constant dense<0xFF800000> : vector<504xf32>
    %11 = vector.multi_reduction <maximumf>, %6, %cst_8 [1] : vector<504x4xf32> to vector<504xf32>
    %12 = vector.shape_cast %11 : vector<504xf32> to vector<504x1xf32>
    %13 = vector.broadcast %12 : vector<504x1xf32> to vector<504x4xf32>
    %14 = arith.subf %6, %13 : vector<504x4xf32>
    %15 = math.exp %14 : vector<504x4xf32>
    %cst_9 = arith.constant dense<0.000000e+00> : vector<504xf32>
    %16 = vector.multi_reduction <add>, %15, %cst_9 [1] : vector<504x4xf32> to vector<504xf32>
    %17 = vector.shape_cast %16 : vector<504xf32> to vector<504x1xf32>
    %18 = math.log %17 : vector<504x1xf32>
    %19 = arith.addf %12, %18 : vector<504x1xf32>
    %cst_10 = arith.constant -1.000000e+30 : f32
    %20 = vector.broadcast %cst_10 : f32 to vector<504x1xf32>
    %21 = arith.select %10, %19, %20 : vector<504x1xi1>, vector<504x1xf32>
    %cst_11 = arith.constant dense<0xFF800000> : vector<1xf32>
    %22 = vector.multi_reduction <maximumf>, %21, %cst_11 [0] : vector<504x1xf32> to vector<1xf32>
    %23 = vector.shape_cast %22 : vector<1xf32> to vector<1x1xf32>
    %24 = vector.broadcast %23 : vector<1x1xf32> to vector<504x1xf32>
    %25 = arith.subf %21, %24 : vector<504x1xf32>
    %26 = math.exp %25 : vector<504x1xf32>
    %cst_12 = arith.constant 0.000000e+00 : f32
    %27 = vector.broadcast %cst_12 : f32 to vector<504x1xf32>
    %28 = arith.select %10, %26, %27 : vector<504x1xi1>, vector<504x1xf32>
    %cst_13 = arith.constant dense<0.000000e+00> : vector<1xf32>
    %29 = vector.multi_reduction <add>, %28, %cst_13 [0] : vector<504x1xf32> to vector<1xf32>
    %30 = vector.shape_cast %29 : vector<1xf32> to vector<1x1xf32>
    %31 = tpu.reciprocal %30 {approx = true} : vector<1x1xf32> -> vector<1x1xf32>
    %32 = arith.mulf %30, %31 : vector<1x1xf32>
    %cst_14 = arith.constant 2.000000e+00 : f32
    %33 = vector.broadcast %cst_14 : f32 to vector<1x1xf32>
    %34 = arith.subf %33, %32 : vector<1x1xf32>
    %35 = arith.mulf %31, %34 : vector<1x1xf32>
    %36 = vector.broadcast %35 : vector<1x1xf32> to vector<504x1xf32>
    %37 = arith.mulf %28, %36 : vector<504x1xf32>
    %c0_15 = arith.constant 0 : index
    %c0_16 = arith.constant 0 : index
    %38 = vector.load %arg7[%c0_15, %c0_16] : memref<504x1xf32, #tpu.memory_space<vmem>>, vector<504x1xf32>
    tpu.vector_store %arg7[%c0_15, %c0_16], %37 {strides = array<i32>} : memref<504x1xf32, #tpu.memory_space<vmem>>, vector<504x1xf32>,
    %39 = arith.sitofp %0 : i32 to f32
    %40 = vector.broadcast %39 : f32 to vector<504x1xf32>
    %41 = arith.mulf %37, %40 : vector<504x1xf32>
    %42 = vector.broadcast %41 : vector<504x1xf32> to vector<504x256xf32>
    %43 = arith.mulf %1, %42 : vector<504x256xf32>
    %c0_17 = arith.constant 0 : index
    %c0_18 = arith.constant 0 : index
    %44 = vector.load %arg5[%c0_17, %c0_18] : memref<504x256xf32, #tpu.memory_space<vmem>>, vector<504x256xf32>
    tpu.vector_store %arg5[%c0_17, %c0_18], %43 {strides = array<i32>} : memref<504x256xf32, #tpu.memory_space<vmem>>, vector<504x256xf32>,
    return
  }
  func.func @transform_0(%arg0: i32, %arg1: memref<1xi32, #tpu.memory_space<smem>>) -> (i32, i32) {
    %c0_i32 = arith.constant 0 : i32
    %c0_i32_0 = arith.constant 0 : i32
    %c0_i32_1 = arith.constant 0 : i32
    return %c0_i32, %c0_i32_0 : i32, i32
  }
  func.func @transform_1(%arg0: i32, %arg1: memref<1xi32, #tpu.memory_space<smem>>) -> (i32, i32) {
    %c0_i32 = arith.constant 0 : i32
    %c0_i32_0 = arith.constant 0 : i32
    %c0_i32_1 = arith.constant 0 : i32
    return %c0_i32, %c0_i32_0 : i32, i32
  }
  func.func @transform_2(%arg0: i32, %arg1: memref<1xi32, #tpu.memory_space<smem>>) -> (i32, i32) {
    %c0_i32 = arith.constant 0 : i32
    %c0_i32_0 = arith.constant 0 : i32
    %c0_i32_1 = arith.constant 0 : i32
    return %c0_i32, %c0_i32_0 : i32, i32
  }
  func.func @transform_3(%arg0: i32, %arg1: memref<1xi32, #tpu.memory_space<smem>>) -> (i32, i32) {
    %c0_i32 = arith.constant 0 : i32
    %c0_i32_0 = arith.constant 0 : i32
    %c0_i32_1 = arith.constant 0 : i32
    return %c0_i32, %c0_i32_0 : i32, i32
  }
  func.func @transform_4(%arg0: i32, %arg1: memref<1xi32, #tpu.memory_space<smem>>) -> (i32, i32) {
    %c0_i32 = arith.constant 0 : i32
    %c0_i32_0 = arith.constant 0 : i32
    %c0_i32_1 = arith.constant 0 : i32
    return %c0_i32, %c0_i32_0 : i32, i32
  }
  func.func @transform_5(%arg0: i32, %arg1: memref<1xi32, #tpu.memory_space<smem>>) -> (i32, i32) {
    %c0_i32 = arith.constant 0 : i32
    %c0_i32_0 = arith.constant 0 : i32
    %c0_i32_1 = arith.constant 0 : i32
    return %c0_i32, %c0_i32_0 : i32, i32
  }
}

</mosaic_0001>

<llo_original>
// kernel: tpu_custom_call.1
$region0: #{tpu_custom_call.1}
  #allocation0 [shape = 'u32[]', space=smem, size = 0x4, offset = 0x4, fixed_abs, tag = 'smem constant byte address 0x4 - core index']
  #allocation1 [shape = 'u32[144,128]{1,0:T(1,128)}', space=vmem, size = 0x12000, scoped, tag = 'internal scratch']
  #allocation2 [shape = 's32[1]{0}', space=sflag, size = 0x4, scoped, tag = 'scoped memory for tpu_custom_call.1']
  #allocation3 [shape = 's32[1]{0:T(128)S(6)}', space=smem, size = 0x200, scoped, tag = 'prefetched SMEM operand 0']
  %s0 = inlined_call_operand.<no memory space> [shape: s32[1], index: 0, kind: input, shape index: {}]
  %s1 = inlined_call_operand.hbm [shape: f32[504,256], index: 1, kind: input, shape index: {}]
  %s2 = inlined_call_operand.vmem [shape: f32[256,4], index: 2, kind: input, shape index: {}]
  %s3 = inlined_call_operand.vmem [shape: f32[1,4], index: 3, kind: input, shape index: {}]
  %s4 = inlined_call_operand.hbm [shape: f32[504,256], index: 4, kind: output, shape index: {0}]
  %s5 = inlined_call_operand.vmem [shape: f32[504,4], index: 5, kind: output, shape index: {1}]
  %s6 = inlined_call_operand.vmem [shape: f32[504,1], index: 6, kind: output, shape index: {2}]
  %7 = xla_tuple %s4, %s5, %s6
  %s8 = sld [smem:[#allocation0]]
  $region42: #{tpu_custom_call.1} parent=0
    _
  %s10 = ssub.s32 1, %s8
  %s11 = scalar_select 0, %s10, %s8
  %12 = sst [smem:[#allocation3]] %s0
  $region1: #{tpu_custom_call.1} parent=0
    #allocation4 [shape = 'u8[516096]{0}', space=vmem, size = 0x7e000, scoped, tag = 'input window, operand 1, single buffered']
    #allocation5 [shape = 's32[1]{0}', space=sflag, size = 0x4, scoped, tag = 'scoped memory for tpu_custom_call.1']
    #allocation6 [shape = 's32[1]{0}', space=sflag, size = 0x4, scoped, tag = 'scoped memory for tpu_custom_call.1']
    #allocation7 [shape = 'u8[516096]{0}', space=vmem, size = 0x7e000, scoped, tag = 'output window, operand 0, single buffered']
    %13 = vsyncpa [#allocation5], 0
    %14 = vsyncpa [#allocation6], 0
    // Predicated region
    $region2: #{tpu_custom_call.1} parent=1 // pred_check
      _
    $region3: #{tpu_custom_call.1} parent=1 // pred_check_branch
      %16 = sbr.rel (0) target = $region5
    $region4: #{tpu_custom_call.1} parent=1 // pred_region
      %s18 = ssub.s32 16128, 16128
      %19 = vsyncadd [#allocation5], %s18
      %s20 = sshll.u32 [#allocation4], 4
      %s21 = int_to_ptr.vmem [resolvable:$true] %s20
      %26 = dma.hbm_to_vmem [thread:$0]  %s1, 16128, %s21, [#allocation5], 256, 256, 16
    $region5: #{tpu_custom_call.1} parent=1 // pred_fallthru
      _
    // Predicated region
    $region6: #{tpu_custom_call.1} parent=1 // pred_check
      _
    $region7: #{tpu_custom_call.1} parent=1 // pred_check_branch
      %28 = sbr.rel (0) target = $region9
    $region8: #{tpu_custom_call.1} parent=1 // pred_region
      _
    $region9: #{tpu_custom_call.1} parent=1 // pred_fallthru
      _
    // Predicated region
    $region10: #{tpu_custom_call.1} parent=1 // pred_check
      _
    $region11: #{tpu_custom_call.1} parent=1 // pred_check_branch
      %30 = sbr.rel (0) target = $region13
    $region12: #{tpu_custom_call.1} parent=1 // pred_region
      _
    $region13: #{tpu_custom_call.1} parent=1 // pred_fallthru
      _
    // Predicated region
    $region14: #{tpu_custom_call.1} parent=1 // pred_check
      _
    $region15: #{tpu_custom_call.1} parent=1 // pred_check_branch
      %32 = sbr.rel (0) target = $region17
    $region16: #{tpu_custom_call.1} parent=1 // pred_region
      %33 = dma.done [#allocation5], 16128
    $region17: #{tpu_custom_call.1} parent=1 // pred_fallthru
      _
    %s34 = sld [smem:[#allocation3]]
    %v35 = vld [vmem:[#allocation4] sm:$0xff]
    %v36 = vld [vmem:[#allocation4 + $0x8] sm:$0xff]
    %v37 = vld [vmem:[#allocation4 + $0x10] sm:$0xff]
    %v38 = vld [vmem:[#allocation4 + $0x18] sm:$0xff]
    %v39 = vld [vmem:[#allocation4 + $0x20] sm:$0xff]
    %v40 = vld [vmem:[#allocation4 + $0x28] sm:$0xff]
    %v41 = vld [vmem:[#allocation4 + $0x30] sm:$0xff]
    %v42 = vld [vmem:[#allocation4 + $0x38] sm:$0xff]
    %v43 = vld [vmem:[#allocation4 + $0x40] sm:$0xff]
    %v44 = vld [vmem:[#allocation4 + $0x48] sm:$0xff]
    %v45 = vld [vmem:[#allocation4 + $0x50] sm:$0xff]
    %v46 = vld [vmem:[#allocation4 + $0x58] sm:$0xff]
    %v47 = vld [vmem:[#allocation4 + $0x60] sm:$0xff]
    %v48 = vld [vmem:[#allocation4 + $0x68] sm:$0xff]
    %v49 = vld [vmem:[#allocation4 + $0x70] sm:$0xff]
    %v50 = vld [vmem:[#allocation4 + $0x78] sm:$0xff]
    %v51 = vld [vmem:[#allocation4 + $0x80] sm:$0xff]
    %v52 = vld [vmem:[#allocation4 + $0x88] sm:$0xff]
    %v53 = vld [vmem:[#allocation4 + $0x90] sm:$0xff]
    %v54 = vld [vmem:[#allocation4 + $0x98] sm:$0xff]
    %v55 = vld [vmem:[#allocation4 + $0xa0] sm:$0xff]
    %v56 = vld [vmem:[#allocation4 + $0xa8] sm:$0xff]
    %v57 = vld [vmem:[#allocation4 + $0xb0] sm:$0xff]
    %v58 = vld [vmem:[#allocation4 + $0xb8] sm:$0xff]
    %v59 = vld [vmem:[#allocation4 + $0xc0] sm:$0xff]
    %v60 = vld [vmem:[#allocation4 + $0xc8] sm:$0xff]
    %v61 = vld [vmem:[#allocation4 + $0xd0] sm:$0xff]
    %v62 = vld [vmem:[#allocation4 + $0xd8] sm:$0xff]
    %v63 = vld [vmem:[#allocation4 + $0xe0] sm:$0xff]
    %v64 = vld [vmem:[#allocation4 + $0xe8] sm:$0xff]
    %v65 = vld [vmem:[#allocation4 + $0xf0] sm:$0xff]
    %v66 = vld [vmem:[#allocation4 + $0xf8] sm:$0xff]
    %v67 = vld [vmem:[#allocation4 + $0x100] sm:$0xff]
    %v68 = vld [vmem:[#allocation4 + $0x108] sm:$0xff]
    %v69 = vld [vmem:[#allocation4 + $0x110] sm:$0xff]
    %v70 = vld [vmem:[#allocation4 + $0x118] sm:$0xff]
    %v71 = vld [vmem:[#allocation4 + $0x120] sm:$0xff]
    %v72 = vld [vmem:[#allocation4 + $0x128] sm:$0xff]
    %v73 = vld [vmem:[#allocation4 + $0x130] sm:$0xff]
    %v74 = vld [vmem:[#allocation4 + $0x138] sm:$0xff]
    %v75 = vld [vmem:[#allocation4 + $0x140] sm:$0xff]
    %v76 = vld [vmem:[#allocation4 + $0x148] sm:$0xff]
    %v77 = vld [vmem:[#allocation4 + $0x150] sm:$0xff]
    %v78 = vld [vmem:[#allocation4 + $0x158] sm:$0xff]
    %v79 = vld [vmem:[#allocation4 + $0x160] sm:$0xff]
    %v80 = vld [vmem:[#allocation4 + $0x168] sm:$0xff]
    %v81 = vld [vmem:[#allocation4 + $0x170] sm:$0xff]
    %v82 = vld [vmem:[#allocation4 + $0x178] sm:$0xff]
    %v83 = vld [vmem:[#allocation4 + $0x180] sm:$0xff]
    %v84 = vld [vmem:[#allocation4 + $0x188] sm:$0xff]
    %v85 = vld [vmem:[#allocation4 + $0x190] sm:$0xff]
    %v86 = vld [vmem:[#allocation4 + $0x198] sm:$0xff]
    %v87 = vld [vmem:[#allocation4 + $0x1a0] sm:$0xff]
    %v88 = vld [vmem:[#allocation4 + $0x1a8] sm:$0xff]
    %v89 = vld [vmem:[#allocation4 + $0x1b0] sm:$0xff]
    %v90 = vld [vmem:[#allocation4 + $0x1b8] sm:$0xff]
    %v91 = vld [vmem:[#allocation4 + $0x1c0] sm:$0xff]
    %v92 = vld [vmem:[#allocation4 + $0x1c8] sm:$0xff]
    %v93 = vld [vmem:[#allocation4 + $0x1d0] sm:$0xff]
    %v94 = vld [vmem:[#allocation4 + $0x1d8] sm:$0xff]
    %v95 = vld [vmem:[#allocation4 + $0x1e0] sm:$0xff]
    %v96 = vld [vmem:[#allocation4 + $0x1e8] sm:$0xff]
    %v97 = vld [vmem:[#allocation4 + $0x1f0] sm:$0xff]
    %v98 = vld [vmem:[#allocation4 + $0x1f8] sm:$0xff]
    %v99 = vld [vmem:[#allocation4 + $0x200] sm:$0xff]
    %v100 = vld [vmem:[#allocation4 + $0x208] sm:$0xff]
    %v101 = vld [vmem:[#allocation4 + $0x210] sm:$0xff]
    %v102 = vld [vmem:[#allocation4 + $0x218] sm:$0xff]
    %v103 = vld [vmem:[#allocation4 + $0x220] sm:$0xff]
    %v104 = vld [vmem:[#allocation4 + $0x228] sm:$0xff]
    %v105 = vld [vmem:[#allocation4 + $0x230] sm:$0xff]
    %v106 = vld [vmem:[#allocation4 + $0x238] sm:$0xff]
    %v107 = vld [vmem:[#allocation4 + $0x240] sm:$0xff]
    %v108 = vld [vmem:[#allocation4 + $0x248] sm:$0xff]
    %v109 = vld [vmem:[#allocation4 + $0x250] sm:$0xff]
    %v110 = vld [vmem:[#allocation4 + $0x258] sm:$0xff]
    %v111 = vld [vmem:[#allocation4 + $0x260] sm:$0xff]
    %v112 = vld [vmem:[#allocation4 + $0x268] sm:$0xff]
    %v113 = vld [vmem:[#allocation4 + $0x270] sm:$0xff]
    %v114 = vld [vmem:[#allocation4 + $0x278] sm:$0xff]
    %v115 = vld [vmem:[#allocation4 + $0x280] sm:$0xff]
    %v116 = vld [vmem:[#allocation4 + $0x288] sm:$0xff]
    %v117 = vld [vmem:[#allocation4 + $0x290] sm:$0xff]
    %v118 = vld [vmem:[#allocation4 + $0x298] sm:$0xff]
    %v119 = vld [vmem:[#allocation4 + $0x2a0] sm:$0xff]
    %v120 = vld [vmem:[#allocation4 + $0x2a8] sm:$0xff]
    %v121 = vld [vmem:[#allocation4 + $0x2b0] sm:$0xff]
    %v122 = vld [vmem:[#allocation4 + $0x2b8] sm:$0xff]
    %v123 = vld [vmem:[#allocation4 + $0x2c0] sm:$0xff]
    %v124 = vld [vmem:[#allocation4 + $0x2c8] sm:$0xff]
    %v125 = vld [vmem:[#allocation4 + $0x2d0] sm:$0xff]
    %v126 = vld [vmem:[#allocation4 + $0x2d8] sm:$0xff]
    %v127 = vld [vmem:[#allocation4 + $0x2e0] sm:$0xff]
    %v128 = vld [vmem:[#allocation4 + $0x2e8] sm:$0xff]
    %v129 = vld [vmem:[#allocation4 + $0x2f0] sm:$0xff]
    %v130 = vld [vmem:[#allocation4 + $0x2f8] sm:$0xff]
    %v131 = vld [vmem:[#allocation4 + $0x300] sm:$0xff]
    %v132 = vld [vmem:[#allocation4 + $0x308] sm:$0xff]
    %v133 = vld [vmem:[#allocation4 + $0x310] sm:$0xff]
    %v134 = vld [vmem:[#allocation4 + $0x318] sm:$0xff]
    %v135 = vld [vmem:[#allocation4 + $0x320] sm:$0xff]
    %v136 = vld [vmem:[#allocation4 + $0x328] sm:$0xff]
    %v137 = vld [vmem:[#allocation4 + $0x330] sm:$0xff]
    %v138 = vld [vmem:[#allocation4 + $0x338] sm:$0xff]
    %v139 = vld [vmem:[#allocation4 + $0x340] sm:$0xff]
    %v140 = vld [vmem:[#allocation4 + $0x348] sm:$0xff]
    %v141 = vld [vmem:[#allocation4 + $0x350] sm:$0xff]
    %v142 = vld [vmem:[#allocation4 + $0x358] sm:$0xff]
    %v143 = vld [vmem:[#allocation4 + $0x360] sm:$0xff]
    %v144 = vld [vmem:[#allocation4 + $0x368] sm:$0xff]
    %v145 = vld [vmem:[#allocation4 + $0x370] sm:$0xff]
    %v146 = vld [vmem:[#allocation4 + $0x378] sm:$0xff]
    %v147 = vld [vmem:[#allocation4 + $0x380] sm:$0xff]
    %v148 = vld [vmem:[#allocation4 + $0x388] sm:$0xff]
    %v149 = vld [vmem:[#allocation4 + $0x390] sm:$0xff]
    %v150 = vld [vmem:[#allocation4 + $0x398] sm:$0xff]
    %v151 = vld [vmem:[#allocation4 + $0x3a0] sm:$0xff]
    %v152 = vld [vmem:[#allocation4 + $0x3a8] sm:$0xff]
    %v153 = vld [vmem:[#allocation4 + $0x3b0] sm:$0xff]
    %v154 = vld [vmem:[#allocation4 + $0x3b8] sm:$0xff]
    %v155 = vld [vmem:[#allocation4 + $0x3c0] sm:$0xff]
    %v156 = vld [vmem:[#allocation4 + $0x3c8] sm:$0xff]
    %v157 = vld [vmem:[#allocation4 + $0x3d0] sm:$0xff]
    %v158 = vld [vmem:[#allocation4 + $0x3d8] sm:$0xff]
    %v159 = vld [vmem:[#allocation4 + $0x3e0] sm:$0xff]
    %v160 = vld [vmem:[#allocation4 + $0x3e8] sm:$0xff]
    %v161 = vld [vmem:[%s2] sm:$0xff]
    %v162 = vld [vmem:[%s2 + $0x8] sm:$0xff]
    %v163 = vld [vmem:[%s2 + $0x10] sm:$0xff]
    %v164 = vld [vmem:[%s2 + $0x18] sm:$0xff]
    %v165 = vld [vmem:[%s2 + $0x20] sm:$0xff]
    %v166 = vld [vmem:[%s2 + $0x28] sm:$0xff]
    %v167 = vld [vmem:[%s2 + $0x30] sm:$0xff]
    %v168 = vld [vmem:[%s2 + $0x38] sm:$0xff]
    %v169 = vld [vmem:[%s2 + $0x40] sm:$0xff]
    %v170 = vld [vmem:[%s2 + $0x48] sm:$0xff]
    %v171 = vld [vmem:[%s2 + $0x50] sm:$0xff]
    %v172 = vld [vmem:[%s2 + $0x58] sm:$0xff]
    %v173 = vld [vmem:[%s2 + $0x60] sm:$0xff]
    %v174 = vld [vmem:[%s2 + $0x68] sm:$0xff]
    %v175 = vld [vmem:[%s2 + $0x70] sm:$0xff]
    %v176 = vld [vmem:[%s2 + $0x78] sm:$0xff]
    %v177 = vld [vmem:[%s2 + $0x80] sm:$0xff]
    %v178 = vld [vmem:[%s2 + $0x88] sm:$0xff]
    %v179 = vld [vmem:[%s2 + $0x90] sm:$0xff]
    %v180 = vld [vmem:[%s2 + $0x98] sm:$0xff]
    %v181 = vld [vmem:[%s2 + $0xa0] sm:$0xff]
    %v182 = vld [vmem:[%s2 + $0xa8] sm:$0xff]
    %v183 = vld [vmem:[%s2 + $0xb0] sm:$0xff]
    %v184 = vld [vmem:[%s2 + $0xb8] sm:$0xff]
    %v185 = vld [vmem:[%s2 + $0xc0] sm:$0xff]
    %v186 = vld [vmem:[%s2 + $0xc8] sm:$0xff]
    %v187 = vld [vmem:[%s2 + $0xd0] sm:$0xff]
    %v188 = vld [vmem:[%s2 + $0xd8] sm:$0xff]
    %v189 = vld [vmem:[%s2 + $0xe0] sm:$0xff]
    %v190 = vld [vmem:[%s2 + $0xe8] sm:$0xff]
    %v191 = vld [vmem:[%s2 + $0xf0] sm:$0xff]
    %v192 = vld [vmem:[%s2 + $0xf8] sm:$0xff]
    %v193 = vld [vmem:[%s3] sm:$0x1]
    %v195 = vlaneseq
    %v196 = vshrl.u32 %v195, 7
    %v197 = vsub.s32 0, %v196
    %v198 = vrot.slane %v193, %v197
    %200 = vmatprep.subr.mxu0 0.0
    %201 = vmatpush1.msra.mxu0 %v176
    %202 = vmatprep.subr.mxu0 0.0
    %203 = vmatpush1.msra.mxu0 %v175
    %204 = vmatprep.subr.mxu0 0.0
    %205 = vmatpush1.msra.mxu0 %v174
    %206 = vmatprep.subr.mxu0 0.0
    %207 = vmatpush1.msra.mxu0 %v173
    %208 = vmatprep.subr.mxu0 0.0
    %209 = vmatpush1.msra.mxu0 %v172
    %210 = vmatprep.subr.mxu0 0.0
    %211 = vmatpush1.msra.mxu0 %v171
    %212 = vmatprep.subr.mxu0 0.0
    %213 = vmatpush1.msra.mxu0 %v170
    %214 = vmatprep.subr.mxu0 0.0
    %215 = vmatpush1.msra.mxu0 %v169
    %216 = vmatprep.subr.mxu0 0.0
    %217 = vmatpush1.msra.mxu0 %v168
    %218 = vmatprep.subr.mxu0 0.0
    %219 = vmatpush1.msra.mxu0 %v167
    %220 = vmatprep.subr.mxu0 0.0
    %221 = vmatpush1.msra.mxu0 %v166
    %222 = vmatprep.subr.mxu0 0.0
    %223 = vmatpush1.msra.mxu0 %v165
    %224 = vmatprep.subr.mxu0 0.0
    %225 = vmatpush1.msra.mxu0 %v164
    %226 = vmatprep.subr.mxu0 0.0
    %227 = vmatpush1.msra.mxu0 %v163
    %228 = vmatprep.subr.mxu0 0.0
    %229 = vmatpush1.msra.mxu0 %v162
    %230 = vmatprep.subr.mxu0 0.0
    %231 = vmatpush1.msra.mxu0 %v161
    %232 = vmatprep.subr.mxu0 0.0
    %233 = vmatpush2.msra.mxu0 %v192
    %234 = vmatprep.subr.mxu0 0.0
    %235 = vmatpush2.msra.mxu0 %v191
    %236 = vmatprep.subr.mxu0 0.0
    %237 = vmatpush2.msra.mxu0 %v190
    %238 = vmatprep.subr.mxu0 0.0
    %239 = vmatpush2.msra.mxu0 %v189
    %240 = vmatprep.subr.mxu0 0.0
    %241 = vmatpush2.msra.mxu0 %v188
    %242 = vmatprep.subr.mxu0 0.0
    %243 = vmatpush2.msra.mxu0 %v187
    %244 = vmatprep.subr.mxu0 0.0
    %245 = vmatpush2.msra.mxu0 %v186
    %246 = vmatprep.subr.mxu0 0.0
    %247 = vmatpush2.msra.mxu0 %v185
    %248 = vmatprep.subr.mxu0 0.0
    %249 = vmatpush2.msra.mxu0 %v184
    %250 = vmatprep.subr.mxu0 0.0
    %251 = vmatpush2.msra.mxu0 %v183
    %252 = vmatprep.subr.mxu0 0.0
    %253 = vmatpush2.msra.mxu0 %v182
    %254 = vmatprep.subr.mxu0 0.0
    %255 = vmatpush2.msra.mxu0 %v181
    %256 = vmatprep.subr.mxu0 0.0
    %257 = vmatpush2.msra.mxu0 %v180
    %258 = vmatprep.subr.mxu0 0.0
    %259 = vmatpush2.msra.mxu0 %v179
    %260 = vmatprep.subr.mxu0 0.0
    %261 = vmatpush2.msra.mxu0 %v178
    %262 = vmatprep.subr.mxu0 0.0
    %263 = vmatpush2.msra.mxu0 %v177
    %264 = vmatprep.mubr.f32.mxu0 %v36
    %265 = vmatmul.mubr.f32.gmra.mxu0 %v35
    %v266 = vpop.f32.mrf.mxu0
    %v267 = vadd.f32 %v198, %v266
    %v268 = vpop.f32.mrf.mxu0
    %269 = vmatprep.mubr.f32.mxu0 %v38
    %270 = vmatmul.mubr.f32.gmra.mxu0 %v37
    %v271 = vpop.f32.mrf.mxu0
    %v272 = vadd.f32 %v198, %v271
    %v273 = vpop.f32.mrf.mxu0
    %274 = vmatprep.mubr.f32.mxu0 %v40
    %275 = vmatmul.mubr.f32.gmra.mxu0 %v39
    %v276 = vpop.f32.mrf.mxu0
    %v277 = vadd.f32 %v198, %v276
    %v278 = vpop.f32.mrf.mxu0
    %279 = vmatprep.mubr.f32.mxu0 %v42
    %280 = vmatmul.mubr.f32.gmra.mxu0 %v41
    %v281 = vpop.f32.mrf.mxu0
    %v282 = vadd.f32 %v198, %v281
    %v283 = vpop.f32.mrf.mxu0
    %284 = vmatprep.mubr.f32.mxu0 %v44
    %285 = vmatmul.mubr.f32.gmra.mxu0 %v43
    %v286 = vpop.f32.mrf.mxu0
    %v287 = vadd.f32 %v198, %v286
    %v288 = vpop.f32.mrf.mxu0
    %289 = vmatprep.mubr.f32.mxu0 %v46
    %290 = vmatmul.mubr.f32.gmra.mxu0 %v45
    %v291 = vpop.f32.mrf.mxu0
    %v292 = vadd.f32 %v198, %v291
    %v293 = vpop.f32.mrf.mxu0
    %294 = vmatprep.mubr.f32.mxu0 %v48
    %295 = vmatmul.mubr.f32.gmra.mxu0 %v47
    %v296 = vpop.f32.mrf.mxu0
    %v297 = vadd.f32 %v198, %v296
    %v298 = vpop.f32.mrf.mxu0
    %299 = vmatprep.mubr.f32.mxu0 %v50
    %300 = vmatmul.mubr.f32.gmra.mxu0 %v49
    %v301 = vpop.f32.mrf.mxu0
    %v302 = vadd.f32 %v198, %v301
    %v303 = vpop.f32.mrf.mxu0
    %304 = vmatprep.mubr.f32.mxu0 %v52
    %305 = vmatmul.mubr.f32.gmra.mxu0 %v51
    %v306 = vpop.f32.mrf.mxu0
    %v307 = vadd.f32 %v198, %v306
    %v308 = vpop.f32.mrf.mxu0
    %309 = vmatprep.mubr.f32.mxu0 %v54
    %310 = vmatmul.mubr.f32.gmra.mxu0 %v53
    %v311 = vpop.f32.mrf.mxu0
    %v312 = vadd.f32 %v198, %v311
    %v313 = vpop.f32.mrf.mxu0
    %314 = vmatprep.mubr.f32.mxu0 %v56
    %315 = vmatmul.mubr.f32.gmra.mxu0 %v55
    %v316 = vpop.f32.mrf.mxu0
    %v317 = vadd.f32 %v198, %v316
    %v318 = vpop.f32.mrf.mxu0
    %319 = vmatprep.mubr.f32.mxu0 %v58
    %320 = vmatmul.mubr.f32.gmra.mxu0 %v57
    %v321 = vpop.f32.mrf.mxu0
    %v322 = vadd.f32 %v198, %v321
    %v323 = vpop.f32.mrf.mxu0
    %324 = vmatprep.mubr.f32.mxu0 %v60
    %325 = vmatmul.mubr.f32.gmra.mxu0 %v59
    %v326 = vpop.f32.mrf.mxu0
    %v327 = vadd.f32 %v198, %v326
    %v328 = vpop.f32.mrf.mxu0
    %329 = vmatprep.mubr.f32.mxu0 %v62
    %330 = vmatmul.mubr.f32.gmra.mxu0 %v61
    %v331 = vpop.f32.mrf.mxu0
    %v332 = vadd.f32 %v198, %v331
    %v333 = vpop.f32.mrf.mxu0
    %334 = vmatprep.mubr.f32.mxu0 %v64
    %335 = vmatmul.mubr.f32.gmra.mxu0 %v63
    %v336 = vpop.f32.mrf.mxu0
    %v337 = vadd.f32 %v198, %v336
    %v338 = vpop.f32.mrf.mxu0
    %339 = vmatprep.mubr.f32.mxu0 %v66
    %340 = vmatmul.mubr.f32.gmra.mxu0 %v65
    %v341 = vpop.f32.mrf.mxu0
    %v342 = vadd.f32 %v198, %v341
    %v343 = vpop.f32.mrf.mxu0
    %344 = vmatprep.mubr.f32.mxu0 %v68
    %345 = vmatmul.mubr.f32.gmra.mxu0 %v67
    %v346 = vpop.f32.mrf.mxu0
    %v347 = vadd.f32 %v198, %v346
    %v348 = vpop.f32.mrf.mxu0
    %349 = vmatprep.mubr.f32.mxu0 %v70
    %350 = vmatmul.mubr.f32.gmra.mxu0 %v69
    %v351 = vpop.f32.mrf.mxu0
    %v352 = vadd.f32 %v198, %v351
    %v353 = vpop.f32.mrf.mxu0
    %354 = vmatprep.mubr.f32.mxu0 %v72
    %355 = vmatmul.mubr.f32.gmra.mxu0 %v71
    %v356 = vpop.f32.mrf.mxu0
    %v357 = vadd.f32 %v198, %v356
    %v358 = vpop.f32.mrf.mxu0
    %359 = vmatprep.mubr.f32.mxu0 %v74
    %360 = vmatmul.mubr.f32.gmra.mxu0 %v73
    %v361 = vpop.f32.mrf.mxu0
    %v362 = vadd.f32 %v198, %v361
    %v363 = vpop.f32.mrf.mxu0
    %364 = vmatprep.mubr.f32.mxu0 %v76
    %365 = vmatmul.mubr.f32.gmra.mxu0 %v75
    %v366 = vpop.f32.mrf.mxu0
    %v367 = vadd.f32 %v198, %v366
    %v368 = vpop.f32.mrf.mxu0
    %369 = vmatprep.mubr.f32.mxu0 %v78
    %370 = vmatmul.mubr.f32.gmra.mxu0 %v77
    %v371 = vpop.f32.mrf.mxu0
    %v372 = vadd.f32 %v198, %v371
    %v373 = vpop.f32.mrf.mxu0
    %374 = vmatprep.mubr.f32.mxu0 %v80
    %375 = vmatmul.mubr.f32.gmra.mxu0 %v79
    %v376 = vpop.f32.mrf.mxu0
    %v377 = vadd.f32 %v198, %v376
    %v378 = vpop.f32.mrf.mxu0
    %379 = vmatprep.mubr.f32.mxu0 %v82
    %380 = vmatmul.mubr.f32.gmra.mxu0 %v81
    %v381 = vpop.f32.mrf.mxu0
    %v382 = vadd.f32 %v198, %v381
    %v383 = vpop.f32.mrf.mxu0
    %384 = vmatprep.mubr.f32.mxu0 %v84
    %385 = vmatmul.mubr.f32.gmra.mxu0 %v83
    %v386 = vpop.f32.mrf.mxu0
    %v387 = vadd.f32 %v198, %v386
    %v388 = vpop.f32.mrf.mxu0
    %389 = vmatprep.mubr.f32.mxu0 %v86
    %390 = vmatmul.mubr.f32.gmra.mxu0 %v85
    %v391 = vpop.f32.mrf.mxu0
    %v392 = vadd.f32 %v198, %v391
    %v393 = vpop.f32.mrf.mxu0
    %394 = vmatprep.mubr.f32.mxu0 %v88
    %395 = vmatmul.mubr.f32.gmra.mxu0 %v87
    %v396 = vpop.f32.mrf.mxu0
    %v397 = vadd.f32 %v198, %v396
    %v398 = vpop.f32.mrf.mxu0
    %399 = vmatprep.mubr.f32.mxu0 %v90
    %400 = vmatmul.mubr.f32.gmra.mxu0 %v89
    %v401 = vpop.f32.mrf.mxu0
    %v402 = vadd.f32 %v198, %v401
    %v403 = vpop.f32.mrf.mxu0
    %404 = vmatprep.mubr.f32.mxu0 %v92
    %405 = vmatmul.mubr.f32.gmra.mxu0 %v91
    %v406 = vpop.f32.mrf.mxu0
    %v407 = vadd.f32 %v198, %v406
    %v408 = vpop.f32.mrf.mxu0
    %409 = vmatprep.mubr.f32.mxu0 %v94
    %410 = vmatmul.mubr.f32.gmra.mxu0 %v93
    %v411 = vpop.f32.mrf.mxu0
    %v412 = vadd.f32 %v198, %v411
    %v413 = vpop.f32.mrf.mxu0
    %414 = vmatprep.mubr.f32.mxu0 %v96
    %415 = vmatmul.mubr.f32.gmra.mxu0 %v95
    %v416 = vpop.f32.mrf.mxu0
    %v417 = vadd.f32 %v198, %v416
    %v418 = vpop.f32.mrf.mxu0
    %419 = vmatprep.mubr.f32.mxu0 %v98
    %420 = vmatmul.mubr.f32.gmra.mxu0 %v97
    %v421 = vpop.f32.mrf.mxu0
    %v422 = vadd.f32 %v198, %v421
    %v423 = vpop.f32.mrf.mxu0
    %424 = vmatprep.mubr.f32.mxu0 %v100
    %425 = vmatmul.mubr.f32.gmra.mxu0 %v99
    %v426 = vpop.f32.mrf.mxu0
    %v427 = vadd.f32 %v198, %v426
    %v428 = vpop.f32.mrf.mxu0
    %429 = vmatprep.mubr.f32.mxu0 %v102
    %430 = vmatmul.mubr.f32.gmra.mxu0 %v101
    %v431 = vpop.f32.mrf.mxu0
    %v432 = vadd.f32 %v198, %v431
    %v433 = vpop.f32.mrf.mxu0
    %434 = vmatprep.mubr.f32.mxu0 %v104
    %435 = vmatmul.mubr.f32.gmra.mxu0 %v103
    %v436 = vpop.f32.mrf.mxu0
    %v437 = vadd.f32 %v198, %v436
    %v438 = vpop.f32.mrf.mxu0
    %439 = vmatprep.mubr.f32.mxu0 %v106
    %440 = vmatmul.mubr.f32.gmra.mxu0 %v105
    %v441 = vpop.f32.mrf.mxu0
    %v442 = vadd.f32 %v198, %v441
    %v443 = vpop.f32.mrf.mxu0
    %444 = vmatprep.mubr.f32.mxu0 %v108
    %445 = vmatmul.mubr.f32.gmra.mxu0 %v107
    %v446 = vpop.f32.mrf.mxu0
    %v447 = vadd.f32 %v198, %v446
    %v448 = vpop.f32.mrf.mxu0
    %449 = vmatprep.mubr.f32.mxu0 %v110
    %450 = vmatmul.mubr.f32.gmra.mxu0 %v109
    %v451 = vpop.f32.mrf.mxu0
    %v452 = vadd.f32 %v198, %v451
    %v453 = vpop.f32.mrf.mxu0
    %454 = vmatprep.mubr.f32.mxu0 %v112
    %455 = vmatmul.mubr.f32.gmra.mxu0 %v111
    %v456 = vpop.f32.mrf.mxu0
    %v457 = vadd.f32 %v198, %v456
    %v458 = vpop.f32.mrf.mxu0
    %459 = vmatprep.mubr.f32.mxu0 %v114
    %460 = vmatmul.mubr.f32.gmra.mxu0 %v113
    %v461 = vpop.f32.mrf.mxu0
    %v462 = vadd.f32 %v198, %v461
    %v463 = vpop.f32.mrf.mxu0
    %464 = vmatprep.mubr.f32.mxu0 %v116
    %465 = vmatmul.mubr.f32.gmra.mxu0 %v115
    %v466 = vpop.f32.mrf.mxu0
    %v467 = vadd.f32 %v198, %v466
    %v468 = vpop.f32.mrf.mxu0
    %469 = vmatprep.mubr.f32.mxu0 %v118
    %470 = vmatmul.mubr.f32.gmra.mxu0 %v117
    %v471 = vpop.f32.mrf.mxu0
    %v472 = vadd.f32 %v198, %v471
    %v473 = vpop.f32.mrf.mxu0
    %474 = vmatprep.mubr.f32.mxu0 %v120
    %475 = vmatmul.mubr.f32.gmra.mxu0 %v119
    %v476 = vpop.f32.mrf.mxu0
    %v477 = vadd.f32 %v198, %v476
    %v478 = vpop.f32.mrf.mxu0
    %479 = vmatprep.mubr.f32.mxu0 %v122
    %480 = vmatmul.mubr.f32.gmra.mxu0 %v121
    %v481 = vpop.f32.mrf.mxu0
    %v482 = vadd.f32 %v198, %v481
    %v483 = vpop.f32.mrf.mxu0
    %484 = vmatprep.mubr.f32.mxu0 %v124
    %485 = vmatmul.mubr.f32.gmra.mxu0 %v123
    %v486 = vpop.f32.mrf.mxu0
    %v487 = vadd.f32 %v198, %v486
    %v488 = vpop.f32.mrf.mxu0
    %489 = vmatprep.mubr.f32.mxu0 %v126
    %490 = vmatmul.mubr.f32.gmra.mxu0 %v125
    %v491 = vpop.f32.mrf.mxu0
    %v492 = vadd.f32 %v198, %v491
    %v493 = vpop.f32.mrf.mxu0
    %494 = vmatprep.mubr.f32.mxu0 %v128
    %495 = vmatmul.mubr.f32.gmra.mxu0 %v127
    %v496 = vpop.f32.mrf.mxu0
    %v497 = vadd.f32 %v198, %v496
    %v498 = vpop.f32.mrf.mxu0
    %499 = vmatprep.mubr.f32.mxu0 %v130
    %500 = vmatmul.mubr.f32.gmra.mxu0 %v129
    %v501 = vpop.f32.mrf.mxu0
    %v502 = vadd.f32 %v198, %v501
    %v503 = vpop.f32.mrf.mxu0
    %504 = vmatprep.mubr.f32.mxu0 %v132
    %505 = vmatmul.mubr.f32.gmra.mxu0 %v131
    %v506 = vpop.f32.mrf.mxu0
    %v507 = vadd.f32 %v198, %v506
    %v508 = vpop.f32.mrf.mxu0
    %509 = vmatprep.mubr.f32.mxu0 %v134
    %510 = vmatmul.mubr.f32.gmra.mxu0 %v133
    %v511 = vpop.f32.mrf.mxu0
    %v512 = vadd.f32 %v198, %v511
    %v513 = vpop.f32.mrf.mxu0
    %514 = vmatprep.mubr.f32.mxu0 %v136
    %515 = vmatmul.mubr.f32.gmra.mxu0 %v135
    %v516 = vpop.f32.mrf.mxu0
    %v517 = vadd.f32 %v198, %v516
    %v518 = vpop.f32.mrf.mxu0
    %519 = vmatprep.mubr.f32.mxu0 %v138
    %520 = vmatmul.mubr.f32.gmra.mxu0 %v137
    %v521 = vpop.f32.mrf.mxu0
    %v522 = vadd.f32 %v198, %v521
    %v523 = vpop.f32.mrf.mxu0
    %524 = vmatprep.mubr.f32.mxu0 %v140
    %525 = vmatmul.mubr.f32.gmra.mxu0 %v139
    %v526 = vpop.f32.mrf.mxu0
    %v527 = vadd.f32 %v198, %v526
    %v528 = vpop.f32.mrf.mxu0
    %529 = vmatprep.mubr.f32.mxu0 %v142
    %530 = vmatmul.mubr.f32.gmra.mxu0 %v141
    %v531 = vpop.f32.mrf.mxu0
    %v532 = vadd.f32 %v198, %v531
    %v533 = vpop.f32.mrf.mxu0
    %534 = vmatprep.mubr.f32.mxu0 %v144
    %535 = vmatmul.mubr.f32.gmra.mxu0 %v143
    %v536 = vpop.f32.mrf.mxu0
    %v537 = vadd.f32 %v198, %v536
    %v538 = vpop.f32.mrf.mxu0
    %539 = vmatprep.mubr.f32.mxu0 %v146
    %540 = vmatmul.mubr.f32.gmra.mxu0 %v145
    %v541 = vpop.f32.mrf.mxu0
    %v542 = vadd.f32 %v198, %v541
    %v543 = vpop.f32.mrf.mxu0
    %544 = vmatprep.mubr.f32.mxu0 %v148
    %545 = vmatmul.mubr.f32.gmra.mxu0 %v147
    %v546 = vpop.f32.mrf.mxu0
    %v547 = vadd.f32 %v198, %v546
    %v548 = vpop.f32.mrf.mxu0
    %549 = vmatprep.mubr.f32.mxu0 %v150
    %550 = vmatmul.mubr.f32.gmra.mxu0 %v149
    %v551 = vpop.f32.mrf.mxu0
    %v552 = vadd.f32 %v198, %v551
    %v553 = vpop.f32.mrf.mxu0
    %554 = vmatprep.mubr.f32.mxu0 %v152
    %555 = vmatmul.mubr.f32.gmra.mxu0 %v151
    %v556 = vpop.f32.mrf.mxu0
    %v557 = vadd.f32 %v198, %v556
    %v558 = vpop.f32.mrf.mxu0
    %559 = vmatprep.mubr.f32.mxu0 %v154
    %560 = vmatmul.mubr.f32.gmra.mxu0 %v153
    %v561 = vpop.f32.mrf.mxu0
    %v562 = vadd.f32 %v198, %v561
    %v563 = vpop.f32.mrf.mxu0
    %564 = vmatprep.mubr.f32.mxu0 %v156
    %565 = vmatmul.mubr.f32.gmra.mxu0 %v155
    %v566 = vpop.f32.mrf.mxu0
    %v567 = vadd.f32 %v198, %v566
    %v568 = vpop.f32.mrf.mxu0
    %569 = vmatprep.mubr.f32.mxu0 %v158
    %570 = vmatmul.mubr.f32.gmra.mxu0 %v157
    %v571 = vpop.f32.mrf.mxu0
    %v572 = vadd.f32 %v198, %v571
    %v573 = vpop.f32.mrf.mxu0
    %574 = vmatprep.mubr.f32.mxu0 %v160
    %575 = vmatmul.mubr.f32.gmra.mxu0 %v159
    %v576 = vpop.f32.mrf.mxu0
    %v577 = vadd.f32 %v198, %v576
    %v578 = vpop.f32.mrf.mxu0
    %579 = vdwg.mxu0
    %vm580 = vcmask 31744
    %581 = vst.msk [vmem:[%s5] sm:$0xff] %vm580, %v267
    %582 = vst.msk [vmem:[%s5 + $0x8] sm:$0xff] %vm580, %v272
    %583 = vst.msk [vmem:[%s5 + $0x10] sm:$0xff] %vm580, %v277
    %584 = vst.msk [vmem:[%s5 + $0x18] sm:$0xff] %vm580, %v282
    %585 = vst.msk [vmem:[%s5 + $0x20] sm:$0xff] %vm580, %v287
    %586 = vst.msk [vmem:[%s5 + $0x28] sm:$0xff] %vm580, %v292
    %587 = vst.msk [vmem:[%s5 + $0x30] sm:$0xff] %vm580, %v297
    %588 = vst.msk [vmem:[%s5 + $0x38] sm:$0xff] %vm580, %v302
    %589 = vst.msk [vmem:[%s5 + $0x40] sm:$0xff] %vm580, %v307
    %590 = vst.msk [vmem:[%s5 + $0x48] sm:$0xff] %vm580, %v312
    %591 = vst.msk [vmem:[%s5 + $0x50] sm:$0xff] %vm580, %v317
    %592 = vst.msk [vmem:[%s5 + $0x58] sm:$0xff] %vm580, %v322
    %593 = vst.msk [vmem:[%s5 + $0x60] sm:$0xff] %vm580, %v327
    %594 = vst.msk [vmem:[%s5 + $0x68] sm:$0xff] %vm580, %v332
    %595 = vst.msk [vmem:[%s5 + $0x70] sm:$0xff] %vm580, %v337
    %596 = vst.msk [vmem:[%s5 + $0x78] sm:$0xff] %vm580, %v342
    %597 = vst.msk [vmem:[%s5 + $0x80] sm:$0xff] %vm580, %v347
    %598 = vst.msk [vmem:[%s5 + $0x88] sm:$0xff] %vm580, %v352
    %599 = vst.msk [vmem:[%s5 + $0x90] sm:$0xff] %vm580, %v357
    %600 = vst.msk [vmem:[%s5 + $0x98] sm:$0xff] %vm580, %v362
    %601 = vst.msk [vmem:[%s5 + $0xa0] sm:$0xff] %vm580, %v367
    %602 = vst.msk [vmem:[%s5 + $0xa8] sm:$0xff] %vm580, %v372
    %603 = vst.msk [vmem:[%s5 + $0xb0] sm:$0xff] %vm580, %v377
    %604 = vst.msk [vmem:[%s5 + $0xb8] sm:$0xff] %vm580, %v382
    %605 = vst.msk [vmem:[%s5 + $0xc0] sm:$0xff] %vm580, %v387
    %606 = vst.msk [vmem:[%s5 + $0xc8] sm:$0xff] %vm580, %v392
    %607 = vst.msk [vmem:[%s5 + $0xd0] sm:$0xff] %vm580, %v397
    %608 = vst.msk [vmem:[%s5 + $0xd8] sm:$0xff] %vm580, %v402
    %609 = vst.msk [vmem:[%s5 + $0xe0] sm:$0xff] %vm580, %v407
    %610 = vst.msk [vmem:[%s5 + $0xe8] sm:$0xff] %vm580, %v412
    %611 = vst.msk [vmem:[%s5 + $0xf0] sm:$0xff] %vm580, %v417
    %612 = vst.msk [vmem:[%s5 + $0xf8] sm:$0xff] %vm580, %v422
    %613 = vst.msk [vmem:[%s5 + $0x100] sm:$0xff] %vm580, %v427
    %614 = vst.msk [vmem:[%s5 + $0x108] sm:$0xff] %vm580, %v432
    %615 = vst.msk [vmem:[%s5 + $0x110] sm:$0xff] %vm580, %v437
    %616 = vst.msk [vmem:[%s5 + $0x118] sm:$0xff] %vm580, %v442
    %617 = vst.msk [vmem:[%s5 + $0x120] sm:$0xff] %vm580, %v447
    %618 = vst.msk [vmem:[%s5 + $0x128] sm:$0xff] %vm580, %v452
    %619 = vst.msk [vmem:[%s5 + $0x130] sm:$0xff] %vm580, %v457
    %620 = vst.msk [vmem:[%s5 + $0x138] sm:$0xff] %vm580, %v462
    %621 = vst.msk [vmem:[%s5 + $0x140] sm:$0xff] %vm580, %v467
    %622 = vst.msk [vmem:[%s5 + $0x148] sm:$0xff] %vm580, %v472
    %623 = vst.msk [vmem:[%s5 + $0x150] sm:$0xff] %vm580, %v477
    %624 = vst.msk [vmem:[%s5 + $0x158] sm:$0xff] %vm580, %v482
    %625 = vst.msk [vmem:[%s5 + $0x160] sm:$0xff] %vm580, %v487
    %626 = vst.msk [vmem:[%s5 + $0x168] sm:$0xff] %vm580, %v492
    %627 = vst.msk [vmem:[%s5 + $0x170] sm:$0xff] %vm580, %v497
    %628 = vst.msk [vmem:[%s5 + $0x178] sm:$0xff] %vm580, %v502
    %629 = vst.msk [vmem:[%s5 + $0x180] sm:$0xff] %vm580, %v507
    %630 = vst.msk [vmem:[%s5 + $0x188] sm:$0xff] %vm580, %v512
    %631 = vst.msk [vmem:[%s5 + $0x190] sm:$0xff] %vm580, %v517
    %632 = vst.msk [vmem:[%s5 + $0x198] sm:$0xff] %vm580, %v522
    %633 = vst.msk [vmem:[%s5 + $0x1a0] sm:$0xff] %vm580, %v527
    %634 = vst.msk [vmem:[%s5 + $0x1a8] sm:$0xff] %vm580, %v532
    %635 = vst.msk [vmem:[%s5 + $0x1b0] sm:$0xff] %vm580, %v537
    %636 = vst.msk [vmem:[%s5 + $0x1b8] sm:$0xff] %vm580, %v542
    %637 = vst.msk [vmem:[%s5 + $0x1c0] sm:$0xff] %vm580, %v547
    %638 = vst.msk [vmem:[%s5 + $0x1c8] sm:$0xff] %vm580, %v552
    %639 = vst.msk [vmem:[%s5 + $0x1d0] sm:$0xff] %vm580, %v557
    %640 = vst.msk [vmem:[%s5 + $0x1d8] sm:$0xff] %vm580, %v562
    %641 = vst.msk [vmem:[%s5 + $0x1e0] sm:$0xff] %vm580, %v567
    %642 = vst.msk [vmem:[%s5 + $0x1e8] sm:$0xff] %vm580, %v572
    %643 = vst.msk [vmem:[%s5 + $0x1f0] sm:$0xff] %vm580, %v577
    %v644 = vlaneseq
    %v645 = vshrl.u32 %v644, 7
    %v646 = vadd.s32 %v645, 8
    %v647 = vadd.s32 %v645, 16
    %v648 = vadd.s32 %v645, 24
    %v649 = vadd.s32 %v645, 32
    %v650 = vadd.s32 %v645, 40
    %v651 = vadd.s32 %v645, 48
    %v652 = vadd.s32 %v645, 56
    %v653 = vadd.s32 %v645, 64
    %v654 = vadd.s32 %v645, 72
    %v655 = vadd.s32 %v645, 80
    %v656 = vadd.s32 %v645, 88
    %v657 = vadd.s32 %v645, 96
    %v658 = vadd.s32 %v645, 104
    %v659 = vadd.s32 %v645, 112
    %v660 = vadd.s32 %v645, 120
    %v661 = vadd.s32 %v645, 128
    %v662 = vadd.s32 %v645, 136
    %v663 = vadd.s32 %v645, 144
    %v664 = vadd.s32 %v645, 152
    %v665 = vadd.s32 %v645, 160
    %v666 = vadd.s32 %v645, 168
    %v667 = vadd.s32 %v645, 176
    %v668 = vadd.s32 %v645, 184
    %v669 = vadd.s32 %v645, 192
    %v670 = vadd.s32 %v645, 200
    %v671 = vadd.s32 %v645, 208
    %v672 = vadd.s32 %v645, 216
    %v673 = vadd.s32 %v645, 224
    %v674 = vadd.s32 %v645, 232
    %v675 = vadd.s32 %v645, 240
    %v676 = vadd.s32 %v645, 248
    %v677 = vadd.s32 %v645, 256
    %v678 = vadd.s32 %v645, 264
    %v679 = vadd.s32 %v645, 272
    %v680 = vadd.s32 %v645, 280
    %v681 = vadd.s32 %v645, 288
    %v682 = vadd.s32 %v645, 296
    %v683 = vadd.s32 %v645, 304
    %v684 = vadd.s32 %v645, 312
    %v685 = vadd.s32 %v645, 320
    %v686 = vadd.s32 %v645, 328
    %v687 = vadd.s32 %v645, 336
    %v688 = vadd.s32 %v645, 344
    %v689 = vadd.s32 %v645, 352
    %v690 = vadd.s32 %v645, 360
    %v691 = vadd.s32 %v645, 368
    %v692 = vadd.s32 %v645, 376
    %v693 = vadd.s32 %v645, 384
    %v694 = vadd.s32 %v645, 392
    %v695 = vadd.s32 %v645, 400
    %v696 = vadd.s32 %v645, 408
    %v697 = vadd.s32 %v645, 416
    %v698 = vadd.s32 %v645, 424
    %v699 = vadd.s32 %v645, 432
    %v700 = vadd.s32 %v645, 440
    %v701 = vadd.s32 %v645, 448
    %v702 = vadd.s32 %v645, 456
    %v703 = vadd.s32 %v645, 464
    %v704 = vadd.s32 %v645, 472
    %v705 = vadd.s32 %v645, 480
    %v706 = vadd.s32 %v645, 488
    %v707 = vadd.s32 %v645, 496
    %v708 = vstv %s34
    %vm709 = vcmp.lt.s32.totalorder %v645, %v708
    %vm710 = vcmp.lt.s32.totalorder %v646, %v708
    %vm711 = vcmp.lt.s32.totalorder %v647, %v708
    %vm712 = vcmp.lt.s32.totalorder %v648, %v708
    %vm713 = vcmp.lt.s32.totalorder %v649, %v708
    %vm714 = vcmp.lt.s32.totalorder %v650, %v708
    %vm715 = vcmp.lt.s32.totalorder %v651, %v708
    %vm716 = vcmp.lt.s32.totalorder %v652, %v708
    %vm717 = vcmp.lt.s32.totalorder %v653, %v708
    %vm718 = vcmp.lt.s32.totalorder %v654, %v708
    %vm719 = vcmp.lt.s32.totalorder %v655, %v708
    %vm720 = vcmp.lt.s32.totalorder %v656, %v708
    %vm721 = vcmp.lt.s32.totalorder %v657, %v708
    %vm722 = vcmp.lt.s32.totalorder %v658, %v708
    %vm723 = vcmp.lt.s32.totalorder %v659, %v708
    %vm724 = vcmp.lt.s32.totalorder %v660, %v708
    %vm725 = vcmp.lt.s32.totalorder %v661, %v708
    %vm726 = vcmp.lt.s32.totalorder %v662, %v708
    %vm727 = vcmp.lt.s32.totalorder %v663, %v708
    %vm728 = vcmp.lt.s32.totalorder %v664, %v708
    %vm729 = vcmp.lt.s32.totalorder %v665, %v708
    %vm730 = vcmp.lt.s32.totalorder %v666, %v708
    %vm731 = vcmp.lt.s32.totalorder %v667, %v708
    %vm732 = vcmp.lt.s32.totalorder %v668, %v708
    %vm733 = vcmp.lt.s32.totalorder %v669, %v708
    %vm734 = vcmp.lt.s32.totalorder %v670, %v708
    %vm735 = vcmp.lt.s32.totalorder %v671, %v708
    %vm736 = vcmp.lt.s32.totalorder %v672, %v708
    %vm737 = vcmp.lt.s32.totalorder %v673, %v708
    %vm738 = vcmp.lt.s32.totalorder %v674, %v708
    %vm739 = vcmp.lt.s32.totalorder %v675, %v708
    %vm740 = vcmp.lt.s32.totalorder %v676, %v708
    %vm741 = vcmp.lt.s32.totalorder %v677, %v708
    %vm742 = vcmp.lt.s32.totalorder %v678, %v708
    %vm743 = vcmp.lt.s32.totalorder %v679, %v708
    %vm744 = vcmp.lt.s32.totalorder %v680, %v708
    %vm745 = vcmp.lt.s32.totalorder %v681, %v708
    %vm746 = vcmp.lt.s32.totalorder %v682, %v708
    %vm747 = vcmp.lt.s32.totalorder %v683, %v708
    %vm748 = vcmp.lt.s32.totalorder %v684, %v708
    %vm749 = vcmp.lt.s32.totalorder %v685, %v708
    %vm750 = vcmp.lt.s32.totalorder %v686, %v708
    %vm751 = vcmp.lt.s32.totalorder %v687, %v708
    %vm752 = vcmp.lt.s32.totalorder %v688, %v708
    %vm753 = vcmp.lt.s32.totalorder %v689, %v708
    %vm754 = vcmp.lt.s32.totalorder %v690, %v708
    %vm755 = vcmp.lt.s32.totalorder %v691, %v708
    %vm756 = vcmp.lt.s32.totalorder %v692, %v708
    %vm757 = vcmp.lt.s32.totalorder %v693, %v708
    %vm758 = vcmp.lt.s32.totalorder %v694, %v708
    %vm759 = vcmp.lt.s32.totalorder %v695, %v708
    %vm760 = vcmp.lt.s32.totalorder %v696, %v708
    %vm761 = vcmp.lt.s32.totalorder %v697, %v708
    %vm762 = vcmp.lt.s32.totalorder %v698, %v708
    %vm763 = vcmp.lt.s32.totalorder %v699, %v708
    %vm764 = vcmp.lt.s32.totalorder %v700, %v708
    %vm765 = vcmp.lt.s32.totalorder %v701, %v708
    %vm766 = vcmp.lt.s32.totalorder %v702, %v708
    %vm767 = vcmp.lt.s32.totalorder %v703, %v708
    %vm768 = vcmp.lt.s32.totalorder %v704, %v708
    %vm769 = vcmp.lt.s32.totalorder %v705, %v708
    %vm770 = vcmp.lt.s32.totalorder %v706, %v708
    %vm771 = vcmp.lt.s32.totalorder %v707, %v708
    %v772 = vsel %vm580, %v267, -inf
    %773 = vmax.xlane.f32.xlu0 %v772
    %v774 = vpop.xlane.xlu0 %773
    %v775 = vsel %vm580, %v272, -inf
    %776 = vmax.xlane.f32.xlu0 %v775
    %v777 = vpop.xlane.xlu0 %776
    %v778 = vsel %vm580, %v277, -inf
    %779 = vmax.xlane.f32.xlu0 %v778
    %v780 = vpop.xlane.xlu0 %779
    %v781 = vsel %vm580, %v282, -inf
    %782 = vmax.xlane.f32.xlu0 %v781
    %v783 = vpop.xlane.xlu0 %782
    %v784 = vsel %vm580, %v287, -inf
    %785 = vmax.xlane.f32.xlu0 %v784
    %v786 = vpop.xlane.xlu0 %785
    %v787 = vsel %vm580, %v292, -inf
    %788 = vmax.xlane.f32.xlu0 %v787
    %v789 = vpop.xlane.xlu0 %788
    %v790 = vsel %vm580, %v297, -inf
    %791 = vmax.xlane.f32.xlu0 %v790
    %v792 = vpop.xlane.xlu0 %791
    %v793 = vsel %vm580, %v302, -inf
    %794 = vmax.xlane.f32.xlu0 %v793
    %v795 = vpop.xlane.xlu0 %794
    %v796 = vsel %vm580, %v307, -inf
    %797 = vmax.xlane.f32.xlu0 %v796
    %v798 = vpop.xlane.xlu0 %797
    %v799 = vsel %vm580, %v312, -inf
    %800 = vmax.xlane.f32.xlu0 %v799
    %v801 = vpop.xlane.xlu0 %800
    %v802 = vsel %vm580, %v317, -inf
    %803 = vmax.xlane.f32.xlu0 %v802
    %v804 = vpop.xlane.xlu0 %803
    %v805 = vsel %vm580, %v322, -inf
    %806 = vmax.xlane.f32.xlu0 %v805
    %v807 = vpop.xlane.xlu0 %806
    %v808 = vsel %vm580, %v327, -inf
    %809 = vmax.xlane.f32.xlu0 %v808
    %v810 = vpop.xlane.xlu0 %809
    %v811 = vsel %vm580, %v332, -inf
    %812 = vmax.xlane.f32.xlu0 %v811
    %v813 = vpop.xlane.xlu0 %812
    %v814 = vsel %vm580, %v337, -inf
    %815 = vmax.xlane.f32.xlu0 %v814
    %v816 = vpop.xlane.xlu0 %815
    %v817 = vsel %vm580, %v342, -inf
    %818 = vmax.xlane.f32.xlu0 %v817
    %v819 = vpop.xlane.xlu0 %818
    %v820 = vsel %vm580, %v347, -inf
    %821 = vmax.xlane.f32.xlu0 %v820
    %v822 = vpop.xlane.xlu0 %821
    %v823 = vsel %vm580, %v352, -inf
    %824 = vmax.xlane.f32.xlu0 %v823
    %v825 = vpop.xlane.xlu0 %824
    %v826 = vsel %vm580, %v357, -inf
    %827 = vmax.xlane.f32.xlu0 %v826
    %v828 = vpop.xlane.xlu0 %827
    %v829 = vsel %vm580, %v362, -inf
    %830 = vmax.xlane.f32.xlu0 %v829
    %v831 = vpop.xlane.xlu0 %830
    %v832 = vsel %vm580, %v367, -inf
    %833 = vmax.xlane.f32.xlu0 %v832
    %v834 = vpop.xlane.xlu0 %833
    %v835 = vsel %vm580, %v372, -inf
    %836 = vmax.xlane.f32.xlu0 %v835
    %v837 = vpop.xlane.xlu0 %836
    %v838 = vsel %vm580, %v377, -inf
    %839 = vmax.xlane.f32.xlu0 %v838
    %v840 = vpop.xlane.xlu0 %839
    %v841 = vsel %vm580, %v382, -inf
    %842 = vmax.xlane.f32.xlu0 %v841
    %v843 = vpop.xlane.xlu0 %842
    %v844 = vsel %vm580, %v387, -inf
    %845 = vmax.xlane.f32.xlu0 %v844
    %v846 = vpop.xlane.xlu0 %845
    %v847 = vsel %vm580, %v392, -inf
    %848 = vmax.xlane.f32.xlu0 %v847
    %v849 = vpop.xlane.xlu0 %848
    %v850 = vsel %vm580, %v397, -inf
    %851 = vmax.xlane.f32.xlu0 %v850
    %v852 = vpop.xlane.xlu0 %851
    %v853 = vsel %vm580, %v402, -inf
    %854 = vmax.xlane.f32.xlu0 %v853
    %v855 = vpop.xlane.xlu0 %854
    %v856 = vsel %vm580, %v407, -inf
    %857 = vmax.xlane.f32.xlu0 %v856
    %v858 = vpop.xlane.xlu0 %857
    %v859 = vsel %vm580, %v412, -inf
    %860 = vmax.xlane.f32.xlu0 %v859
    %v861 = vpop.xlane.xlu0 %860
    %v862 = vsel %vm580, %v417, -inf
    %863 = vmax.xlane.f32.xlu0 %v862
    %v864 = vpop.xlane.xlu0 %863
    %v865 = vsel %vm580, %v422, -inf
    %866 = vmax.xlane.f32.xlu0 %v865
    %v867 = vpop.xlane.xlu0 %866
    %v868 = vsel %vm580, %v427, -inf
    %869 = vmax.xlane.f32.xlu0 %v868
    %v870 = vpop.xlane.xlu0 %869
    %v871 = vsel %vm580, %v432, -inf
    %872 = vmax.xlane.f32.xlu0 %v871
    %v873 = vpop.xlane.xlu0 %872
    %v874 = vsel %vm580, %v437, -inf
    %875 = vmax.xlane.f32.xlu0 %v874
    %v876 = vpop.xlane.xlu0 %875
    %v877 = vsel %vm580, %v442, -inf
    %878 = vmax.xlane.f32.xlu0 %v877
    %v879 = vpop.xlane.xlu0 %878
    %v880 = vsel %vm580, %v447, -inf
    %881 = vmax.xlane.f32.xlu0 %v880
    %v882 = vpop.xlane.xlu0 %881
    %v883 = vsel %vm580, %v452, -inf
    %884 = vmax.xlane.f32.xlu0 %v883
    %v885 = vpop.xlane.xlu0 %884
    %v886 = vsel %vm580, %v457, -inf
    %887 = vmax.xlane.f32.xlu0 %v886
    %v888 = vpop.xlane.xlu0 %887
    %v889 = vsel %vm580, %v462, -inf
    %890 = vmax.xlane.f32.xlu0 %v889
    %v891 = vpop.xlane.xlu0 %890
    %v892 = vsel %vm580, %v467, -inf
    %893 = vmax.xlane.f32.xlu0 %v892
    %v894 = vpop.xlane.xlu0 %893
    %v895 = vsel %vm580, %v472, -inf
    %896 = vmax.xlane.f32.xlu0 %v895
    %v897 = vpop.xlane.xlu0 %896
    %v898 = vsel %vm580, %v477, -inf
    %899 = vmax.xlane.f32.xlu0 %v898
    %v900 = vpop.xlane.xlu0 %899
    %v901 = vsel %vm580, %v482, -inf
    %902 = vmax.xlane.f32.xlu0 %v901
    %v903 = vpop.xlane.xlu0 %902
    %v904 = vsel %vm580, %v487, -inf
    %905 = vmax.xlane.f32.xlu0 %v904
    %v906 = vpop.xlane.xlu0 %905
    %v907 = vsel %vm580, %v492, -inf
    %908 = vmax.xlane.f32.xlu0 %v907
    %v909 = vpop.xlane.xlu0 %908
    %v910 = vsel %vm580, %v497, -inf
    %911 = vmax.xlane.f32.xlu0 %v910
    %v912 = vpop.xlane.xlu0 %911
    %v913 = vsel %vm580, %v502, -inf
    %914 = vmax.xlane.f32.xlu0 %v913
    %v915 = vpop.xlane.xlu0 %914
    %v916 = vsel %vm580, %v507, -inf
    %917 = vmax.xlane.f32.xlu0 %v916
    %v918 = vpop.xlane.xlu0 %917
    %v919 = vsel %vm580, %v512, -inf
    %920 = vmax.xlane.f32.xlu0 %v919
    %v921 = vpop.xlane.xlu0 %920
    %v922 = vsel %vm580, %v517, -inf
    %923 = vmax.xlane.f32.xlu0 %v922
    %v924 = vpop.xlane.xlu0 %923
    %v925 = vsel %vm580, %v522, -inf
    %926 = vmax.xlane.f32.xlu0 %v925
    %v927 = vpop.xlane.xlu0 %926
    %v928 = vsel %vm580, %v527, -inf
    %929 = vmax.xlane.f32.xlu0 %v928
    %v930 = vpop.xlane.xlu0 %929
    %v931 = vsel %vm580, %v532, -inf
    %932 = vmax.xlane.f32.xlu0 %v931
    %v933 = vpop.xlane.xlu0 %932
    %v934 = vsel %vm580, %v537, -inf
    %935 = vmax.xlane.f32.xlu0 %v934
    %v936 = vpop.xlane.xlu0 %935
    %v937 = vsel %vm580, %v542, -inf
    %938 = vmax.xlane.f32.xlu0 %v937
    %v939 = vpop.xlane.xlu0 %938
    %v940 = vsel %vm580, %v547, -inf
    %941 = vmax.xlane.f32.xlu0 %v940
    %v942 = vpop.xlane.xlu0 %941
    %v943 = vsel %vm580, %v552, -inf
    %944 = vmax.xlane.f32.xlu0 %v943
    %v945 = vpop.xlane.xlu0 %944
    %v946 = vsel %vm580, %v557, -inf
    %947 = vmax.xlane.f32.xlu0 %v946
    %v948 = vpop.xlane.xlu0 %947
    %v949 = vsel %vm580, %v562, -inf
    %950 = vmax.xlane.f32.xlu0 %v949
    %v951 = vpop.xlane.xlu0 %950
    %v952 = vsel %vm580, %v567, -inf
    %953 = vmax.xlane.f32.xlu0 %v952
    %v954 = vpop.xlane.xlu0 %953
    %v955 = vsel %vm580, %v572, -inf
    %956 = vmax.xlane.f32.xlu0 %v955
    %v957 = vpop.xlane.xlu0 %956
    %v958 = vsel %vm580, %v577, -inf
    %959 = vmax.xlane.f32.xlu0 %v958
    %v960 = vpop.xlane.xlu0 %959
    %v961 = vsub.f32 %v267, %v774
    %v962 = vsub.f32 %v272, %v777
    %v963 = vsub.f32 %v277, %v780
    %v964 = vsub.f32 %v282, %v783
    %v965 = vsub.f32 %v287, %v786
    %v966 = vsub.f32 %v292, %v789
    %v967 = vsub.f32 %v297, %v792
    %v968 = vsub.f32 %v302, %v795
    %v969 = vsub.f32 %v307, %v798
    %v970 = vsub.f32 %v312, %v801
    %v971 = vsub.f32 %v317, %v804
    %v972 = vsub.f32 %v322, %v807
    %v973 = vsub.f32 %v327, %v810
    %v974 = vsub.f32 %v332, %v813
    %v975 = vsub.f32 %v337, %v816
    %v976 = vsub.f32 %v342, %v819
    %v977 = vsub.f32 %v347, %v822
    %v978 = vsub.f32 %v352, %v825
    %v979 = vsub.f32 %v357, %v828
    %v980 = vsub.f32 %v362, %v831
    %v981 = vsub.f32 %v367, %v834
    %v982 = vsub.f32 %v372, %v837
    %v983 = vsub.f32 %v377, %v840
    %v984 = vsub.f32 %v382, %v843
    %v985 = vsub.f32 %v387, %v846
    %v986 = vsub.f32 %v392, %v849
    %v987 = vsub.f32 %v397, %v852
    %v988 = vsub.f32 %v402, %v855
    %v989 = vsub.f32 %v407, %v858
    %v990 = vsub.f32 %v412, %v861
    %v991 = vsub.f32 %v417, %v864
    %v992 = vsub.f32 %v422, %v867
    %v993 = vsub.f32 %v427, %v870
    %v994 = vsub.f32 %v432, %v873
    %v995 = vsub.f32 %v437, %v876
    %v996 = vsub.f32 %v442, %v879
    %v997 = vsub.f32 %v447, %v882
    %v998 = vsub.f32 %v452, %v885
    %v999 = vsub.f32 %v457, %v888
    %v1000 = vsub.f32 %v462, %v891
    %v1001 = vsub.f32 %v467, %v894
    %v1002 = vsub.f32 %v472, %v897
    %v1003 = vsub.f32 %v477, %v900
    %v1004 = vsub.f32 %v482, %v903
    %v1005 = vsub.f32 %v487, %v906
    %v1006 = vsub.f32 %v492, %v909
    %v1007 = vsub.f32 %v497, %v912
    %v1008 = vsub.f32 %v502, %v915
    %v1009 = vsub.f32 %v507, %v918
    %v1010 = vsub.f32 %v512, %v921
    %v1011 = vsub.f32 %v517, %v924
    %v1012 = vsub.f32 %v522, %v927
    %v1013 = vsub.f32 %v527, %v930
    %v1014 = vsub.f32 %v532, %v933
    %v1015 = vsub.f32 %v537, %v936
    %v1016 = vsub.f32 %v542, %v939
    %v1017 = vsub.f32 %v547, %v942
    %v1018 = vsub.f32 %v552, %v945
    %v1019 = vsub.f32 %v557, %v948
    %v1020 = vsub.f32 %v562, %v951
    %v1021 = vsub.f32 %v567, %v954
    %v1022 = vsub.f32 %v572, %v957
    %v1023 = vsub.f32 %v577, %v960
    %v1024 = vmul.f32 %v961, 1.442695
    %v1025 = vpow.pop %v1024
    %v1026 = vmul.f32 %v962, 1.442695
    %v1027 = vpow.pop %v1026
    %v1028 = vmul.f32 %v963, 1.442695
    %v1029 = vpow.pop %v1028
    %v1030 = vmul.f32 %v964, 1.442695
    %v1031 = vpow.pop %v1030
    %v1032 = vmul.f32 %v965, 1.442695
    %v1033 = vpow.pop %v1032
    %v1034 = vmul.f32 %v966, 1.442695
    %v1035 = vpow.pop %v1034
    %v1036 = vmul.f32 %v967, 1.442695
    %v1037 = vpow.pop %v1036
    %v1038 = vmul.f32 %v968, 1.442695
    %v1039 = vpow.pop %v1038
    %v1040 = vmul.f32 %v969, 1.442695
    %v1041 = vpow.pop %v1040
    %v1042 = vmul.f32 %v970, 1.442695
    %v1043 = vpow.pop %v1042
    %v1044 = vmul.f32 %v971, 1.442695
    %v1045 = vpow.pop %v1044
    %v1046 = vmul.f32 %v972, 1.442695
    %v1047 = vpow.pop %v1046
    %v1048 = vmul.f32 %v973, 1.442695
    %v1049 = vpow.pop %v1048
    %v1050 = vmul.f32 %v974, 1.442695
    %v1051 = vpow.pop %v1050
    %v1052 = vmul.f32 %v975, 1.442695
    %v1053 = vpow.pop %v1052
    %v1054 = vmul.f32 %v976, 1.442695
    %v1055 = vpow.pop %v1054
    %v1056 = vmul.f32 %v977, 1.442695
    %v1057 = vpow.pop %v1056
    %v1058 = vmul.f32 %v978, 1.442695
    %v1059 = vpow.pop %v1058
    %v1060 = vmul.f32 %v979, 1.442695
    %v1061 = vpow.pop %v1060
    %v1062 = vmul.f32 %v980, 1.442695
    %v1063 = vpow.pop %v1062
    %v1064 = vmul.f32 %v981, 1.442695
    %v1065 = vpow.pop %v1064
    %v1066 = vmul.f32 %v982, 1.442695
    %v1067 = vpow.pop %v1066
    %v1068 = vmul.f32 %v983, 1.442695
    %v1069 = vpow.pop %v1068
    %v1070 = vmul.f32 %v984, 1.442695
    %v1071 = vpow.pop %v1070
    %v1072 = vmul.f32 %v985, 1.442695
    %v1073 = vpow.pop %v1072
    %v1074 = vmul.f32 %v986, 1.442695
    %v1075 = vpow.pop %v1074
    %v1076 = vmul.f32 %v987, 1.442695
    %v1077 = vpow.pop %v1076
    %v1078 = vmul.f32 %v988, 1.442695
    %v1079 = vpow.pop %v1078
    %v1080 = vmul.f32 %v989, 1.442695
    %v1081 = vpow.pop %v1080
    %v1082 = vmul.f32 %v990, 1.442695
    %v1083 = vpow.pop %v1082
    %v1084 = vmul.f32 %v991, 1.442695
    %v1085 = vpow.pop %v1084
    %v1086 = vmul.f32 %v992, 1.442695
    %v1087 = vpow.pop %v1086
    %v1088 = vmul.f32 %v993, 1.442695
    %v1089 = vpow.pop %v1088
    %v1090 = vmul.f32 %v994, 1.442695
    %v1091 = vpow.pop %v1090
    %v1092 = vmul.f32 %v995, 1.442695
    %v1093 = vpow.pop %v1092
    %v1094 = vmul.f32 %v996, 1.442695
    %v1095 = vpow.pop %v1094
    %v1096 = vmul.f32 %v997, 1.442695
    %v1097 = vpow.pop %v1096
    %v1098 = vmul.f32 %v998, 1.442695
    %v1099 = vpow.pop %v1098
    %v1100 = vmul.f32 %v999, 1.442695
    %v1101 = vpow.pop %v1100
    %v1102 = vmul.f32 %v1000, 1.442695
    %v1103 = vpow.pop %v1102
    %v1104 = vmul.f32 %v1001, 1.442695
    %v1105 = vpow.pop %v1104
    %v1106 = vmul.f32 %v1002, 1.442695
    %v1107 = vpow.pop %v1106
    %v1108 = vmul.f32 %v1003, 1.442695
    %v1109 = vpow.pop %v1108
    %v1110 = vmul.f32 %v1004, 1.442695
    %v1111 = vpow.pop %v1110
    %v1112 = vmul.f32 %v1005, 1.442695
    %v1113 = vpow.pop %v1112
    %v1114 = vmul.f32 %v1006, 1.442695
    %v1115 = vpow.pop %v1114
    %v1116 = vmul.f32 %v1007, 1.442695
    %v1117 = vpow.pop %v1116
    %v1118 = vmul.f32 %v1008, 1.442695
    %v1119 = vpow.pop %v1118
    %v1120 = vmul.f32 %v1009, 1.442695
    %v1121 = vpow.pop %v1120
    %v1122 = vmul.f32 %v1010, 1.442695
    %v1123 = vpow.pop %v1122
    %v1124 = vmul.f32 %v1011, 1.442695
    %v1125 = vpow.pop %v1124
    %v1126 = vmul.f32 %v1012, 1.442695
    %v1127 = vpow.pop %v1126
    %v1128 = vmul.f32 %v1013, 1.442695
    %v1129 = vpow.pop %v1128
    %v1130 = vmul.f32 %v1014, 1.442695
    %v1131 = vpow.pop %v1130
    %v1132 = vmul.f32 %v1015, 1.442695
    %v1133 = vpow.pop %v1132
    %v1134 = vmul.f32 %v1016, 1.442695
    %v1135 = vpow.pop %v1134
    %v1136 = vmul.f32 %v1017, 1.442695
    %v1137 = vpow.pop %v1136
    %v1138 = vmul.f32 %v1018, 1.442695
    %v1139 = vpow.pop %v1138
    %v1140 = vmul.f32 %v1019, 1.442695
    %v1141 = vpow.pop %v1140
    %v1142 = vmul.f32 %v1020, 1.442695
    %v1143 = vpow.pop %v1142
    %v1144 = vmul.f32 %v1021, 1.442695
    %v1145 = vpow.pop %v1144
    %v1146 = vmul.f32 %v1022, 1.442695
    %v1147 = vpow.pop %v1146
    %v1148 = vmul.f32 %v1023, 1.442695
    %v1149 = vpow.pop %v1148
    %v1150 = vsel %vm580, %v1025, 0.0
    %1151 = vadd.xlane.f32.xlu0 %v1150
    %v1152 = vpop.xlane.xlu0 %1151
    %v1153 = vsel %vm580, %v1027, 0.0
    %1154 = vadd.xlane.f32.xlu0 %v1153
    %v1155 = vpop.xlane.xlu0 %1154
    %v1156 = vsel %vm580, %v1029, 0.0
    %1157 = vadd.xlane.f32.xlu0 %v1156
    %v1158 = vpop.xlane.xlu0 %1157
    %v1159 = vsel %vm580, %v1031, 0.0
    %1160 = vadd.xlane.f32.xlu0 %v1159
    %v1161 = vpop.xlane.xlu0 %1160
    %v1162 = vsel %vm580, %v1033, 0.0
    %1163 = vadd.xlane.f32.xlu0 %v1162
    %v1164 = vpop.xlane.xlu0 %1163
    %v1165 = vsel %vm580, %v1035, 0.0
    %1166 = vadd.xlane.f32.xlu0 %v1165
    %v1167 = vpop.xlane.xlu0 %1166
    %v1168 = vsel %vm580, %v1037, 0.0
    %1169 = vadd.xlane.f32.xlu0 %v1168
    %v1170 = vpop.xlane.xlu0 %1169
    %v1171 = vsel %vm580, %v1039, 0.0
    %1172 = vadd.xlane.f32.xlu0 %v1171
    %v1173 = vpop.xlane.xlu0 %1172
    %v1174 = vsel %vm580, %v1041, 0.0
    %1175 = vadd.xlane.f32.xlu0 %v1174
    %v1176 = vpop.xlane.xlu0 %1175
    %v1177 = vsel %vm580, %v1043, 0.0
    %1178 = vadd.xlane.f32.xlu0 %v1177
    %v1179 = vpop.xlane.xlu0 %1178
    %v1180 = vsel %vm580, %v1045, 0.0
    %1181 = vadd.xlane.f32.xlu0 %v1180
    %v1182 = vpop.xlane.xlu0 %1181
    %v1183 = vsel %vm580, %v1047, 0.0
    %1184 = vadd.xlane.f32.xlu0 %v1183
    %v1185 = vpop.xlane.xlu0 %1184
    %v1186 = vsel %vm580, %v1049, 0.0
    %1187 = vadd.xlane.f32.xlu0 %v1186
    %v1188 = vpop.xlane.xlu0 %1187
    %v1189 = vsel %vm580, %v1051, 0.0
    %1190 = vadd.xlane.f32.xlu0 %v1189
    %v1191 = vpop.xlane.xlu0 %1190
    %v1192 = vsel %vm580, %v1053, 0.0
    %1193 = vadd.xlane.f32.xlu0 %v1192
    %v1194 = vpop.xlane.xlu0 %1193
    %v1195 = vsel %vm580, %v1055, 0.0
    %1196 = vadd.xlane.f32.xlu0 %v1195
    %v1197 = vpop.xlane.xlu0 %1196
    %v1198 = vsel %vm580, %v1057, 0.0
    %1199 = vadd.xlane.f32.xlu0 %v1198
    %v1200 = vpop.xlane.xlu0 %1199
    %v1201 = vsel %vm580, %v1059, 0.0
    %1202 = vadd.xlane.f32.xlu0 %v1201
    %v1203 = vpop.xlane.xlu0 %1202
    %v1204 = vsel %vm580, %v1061, 0.0
    %1205 = vadd.xlane.f32.xlu0 %v1204
    %v1206 = vpop.xlane.xlu0 %1205
    %v1207 = vsel %vm580, %v1063, 0.0
    %1208 = vadd.xlane.f32.xlu0 %v1207
    %v1209 = vpop.xlane.xlu0 %1208
    %v1210 = vsel %vm580, %v1065, 0.0
    %1211 = vadd.xlane.f32.xlu0 %v1210
    %v1212 = vpop.xlane.xlu0 %1211
    %v1213 = vsel %vm580, %v1067, 0.0
    %1214 = vadd.xlane.f32.xlu0 %v1213
    %v1215 = vpop.xlane.xlu0 %1214
    %v1216 = vsel %vm580, %v1069, 0.0
    %1217 = vadd.xlane.f32.xlu0 %v1216
    %v1218 = vpop.xlane.xlu0 %1217
    %v1219 = vsel %vm580, %v1071, 0.0
    %1220 = vadd.xlane.f32.xlu0 %v1219
    %v1221 = vpop.xlane.xlu0 %1220
    %v1222 = vsel %vm580, %v1073, 0.0
    %1223 = vadd.xlane.f32.xlu0 %v1222
    %v1224 = vpop.xlane.xlu0 %1223
    %v1225 = vsel %vm580, %v1075, 0.0
    %1226 = vadd.xlane.f32.xlu0 %v1225
    %v1227 = vpop.xlane.xlu0 %1226
    %v1228 = vsel %vm580, %v1077, 0.0
    %1229 = vadd.xlane.f32.xlu0 %v1228
    %v1230 = vpop.xlane.xlu0 %1229
    %v1231 = vsel %vm580, %v1079, 0.0
    %1232 = vadd.xlane.f32.xlu0 %v1231
    %v1233 = vpop.xlane.xlu0 %1232
    %v1234 = vsel %vm580, %v1081, 0.0
    %1235 = vadd.xlane.f32.xlu0 %v1234
    %v1236 = vpop.xlane.xlu0 %1235
    %v1237 = vsel %vm580, %v1083, 0.0
    %1238 = vadd.xlane.f32.xlu0 %v1237
    %v1239 = vpop.xlane.xlu0 %1238
    %v1240 = vsel %vm580, %v1085, 0.0
    %1241 = vadd.xlane.f32.xlu0 %v1240
    %v1242 = vpop.xlane.xlu0 %1241
    %v1243 = vsel %vm580, %v1087, 0.0
    %1244 = vadd.xlane.f32.xlu0 %v1243
    %v1245 = vpop.xlane.xlu0 %1244
    %v1246 = vsel %vm580, %v1089, 0.0
    %1247 = vadd.xlane.f32.xlu0 %v1246
    %v1248 = vpop.xlane.xlu0 %1247
    %v1249 = vsel %vm580, %v1091, 0.0
    %1250 = vadd.xlane.f32.xlu0 %v1249
    %v1251 = vpop.xlane.xlu0 %1250
    %v1252 = vsel %vm580, %v1093, 0.0
    %1253 = vadd.xlane.f32.xlu0 %v1252
    %v1254 = vpop.xlane.xlu0 %1253
    %v1255 = vsel %vm580, %v1095, 0.0
    %1256 = vadd.xlane.f32.xlu0 %v1255
    %v1257 = vpop.xlane.xlu0 %1256
    %v1258 = vsel %vm580, %v1097, 0.0
    %1259 = vadd.xlane.f32.xlu0 %v1258
    %v1260 = vpop.xlane.xlu0 %1259
    %v1261 = vsel %vm580, %v1099, 0.0
    %1262 = vadd.xlane.f32.xlu0 %v1261
    %v1263 = vpop.xlane.xlu0 %1262
    %v1264 = vsel %vm580, %v1101, 0.0
    %1265 = vadd.xlane.f32.xlu0 %v1264
    %v1266 = vpop.xlane.xlu0 %1265
    %v1267 = vsel %vm580, %v1103, 0.0
    %1268 = vadd.xlane.f32.xlu0 %v1267
    %v1269 = vpop.xlane.xlu0 %1268
    %v1270 = vsel %vm580, %v1105, 0.0
    %1271 = vadd.xlane.f32.xlu0 %v1270
    %v1272 = vpop.xlane.xlu0 %1271
    %v1273 = vsel %vm580, %v1107, 0.0
    %1274 = vadd.xlane.f32.xlu0 %v1273
    %v1275 = vpop.xlane.xlu0 %1274
    %v1276 = vsel %vm580, %v1109, 0.0
    %1277 = vadd.xlane.f32.xlu0 %v1276
    %v1278 = vpop.xlane.xlu0 %1277
    %v1279 = vsel %vm580, %v1111, 0.0
    %1280 = vadd.xlane.f32.xlu0 %v1279
    %v1281 = vpop.xlane.xlu0 %1280
    %v1282 = vsel %vm580, %v1113, 0.0
    %1283 = vadd.xlane.f32.xlu0 %v1282
    %v1284 = vpop.xlane.xlu0 %1283
    %v1285 = vsel %vm580, %v1115, 0.0
    %1286 = vadd.xlane.f32.xlu0 %v1285
    %v1287 = vpop.xlane.xlu0 %1286
    %v1288 = vsel %vm580, %v1117, 0.0
    %1289 = vadd.xlane.f32.xlu0 %v1288
    %v1290 = vpop.xlane.xlu0 %1289
    %v1291 = vsel %vm580, %v1119, 0.0
    %1292 = vadd.xlane.f32.xlu0 %v1291
    %v1293 = vpop.xlane.xlu0 %1292
    %v1294 = vsel %vm580, %v1121, 0.0
    %1295 = vadd.xlane.f32.xlu0 %v1294
    %v1296 = vpop.xlane.xlu0 %1295
    %v1297 = vsel %vm580, %v1123, 0.0
    %1298 = vadd.xlane.f32.xlu0 %v1297
    %v1299 = vpop.xlane.xlu0 %1298
    %v1300 = vsel %vm580, %v1125, 0.0
    %1301 = vadd.xlane.f32.xlu0 %v1300
    %v1302 = vpop.xlane.xlu0 %1301
    %v1303 = vsel %vm580, %v1127, 0.0
    %1304 = vadd.xlane.f32.xlu0 %v1303
    %v1305 = vpop.xlane.xlu0 %1304
    %v1306 = vsel %vm580, %v1129, 0.0
    %1307 = vadd.xlane.f32.xlu0 %v1306
    %v1308 = vpop.xlane.xlu0 %1307
    %v1309 = vsel %vm580, %v1131, 0.0
    %1310 = vadd.xlane.f32.xlu0 %v1309
    %v1311 = vpop.xlane.xlu0 %1310
    %v1312 = vsel %vm580, %v1133, 0.0
    %1313 = vadd.xlane.f32.xlu0 %v1312
    %v1314 = vpop.xlane.xlu0 %1313
    %v1315 = vsel %vm580, %v1135, 0.0
    %1316 = vadd.xlane.f32.xlu0 %v1315
    %v1317 = vpop.xlane.xlu0 %1316
    %v1318 = vsel %vm580, %v1137, 0.0
    %1319 = vadd.xlane.f32.xlu0 %v1318
    %v1320 = vpop.xlane.xlu0 %1319
    %v1321 = vsel %vm580, %v1139, 0.0
    %1322 = vadd.xlane.f32.xlu0 %v1321
    %v1323 = vpop.xlane.xlu0 %1322
    %v1324 = vsel %vm580, %v1141, 0.0
    %1325 = vadd.xlane.f32.xlu0 %v1324
    %v1326 = vpop.xlane.xlu0 %1325
    %v1327 = vsel %vm580, %v1143, 0.0
    %1328 = vadd.xlane.f32.xlu0 %v1327
    %v1329 = vpop.xlane.xlu0 %1328
    %v1330 = vsel %vm580, %v1145, 0.0
    %1331 = vadd.xlane.f32.xlu0 %v1330
    %v1332 = vpop.xlane.xlu0 %1331
    %v1333 = vsel %vm580, %v1147, 0.0
    %1334 = vadd.xlane.f32.xlu0 %v1333
    %v1335 = vpop.xlane.xlu0 %1334
    %v1336 = vsel %vm580, %v1149, 0.0
    %1337 = vadd.xlane.f32.xlu0 %v1336
    %v1338 = vpop.xlane.xlu0 %1337
    %v1339 = vlog2.pop %v1152
    %v1340 = vmul.f32 %v1339, 0.6931472
    %v1341 = vlog2.pop %v1155
    %v1342 = vmul.f32 %v1341, 0.6931472
    %v1343 = vlog2.pop %v1158
    %v1344 = vmul.f32 %v1343, 0.6931472
    %v1345 = vlog2.pop %v1161
    %v1346 = vmul.f32 %v1345, 0.6931472
    %v1347 = vlog2.pop %v1164
    %v1348 = vmul.f32 %v1347, 0.6931472
    %v1349 = vlog2.pop %v1167
    %v1350 = vmul.f32 %v1349, 0.6931472
    %v1351 = vlog2.pop %v1170
    %v1352 = vmul.f32 %v1351, 0.6931472
    %v1353 = vlog2.pop %v1173
    %v1354 = vmul.f32 %v1353, 0.6931472
    %v1355 = vlog2.pop %v1176
    %v1356 = vmul.f32 %v1355, 0.6931472
    %v1357 = vlog2.pop %v1179
    %v1358 = vmul.f32 %v1357, 0.6931472
    %v1359 = vlog2.pop %v1182
    %v1360 = vmul.f32 %v1359, 0.6931472
    %v1361 = vlog2.pop %v1185
    %v1362 = vmul.f32 %v1361, 0.6931472
    %v1363 = vlog2.pop %v1188
    %v1364 = vmul.f32 %v1363, 0.6931472
    %v1365 = vlog2.pop %v1191
    %v1366 = vmul.f32 %v1365, 0.6931472
    %v1367 = vlog2.pop %v1194
    %v1368 = vmul.f32 %v1367, 0.6931472
    %v1369 = vlog2.pop %v1197
    %v1370 = vmul.f32 %v1369, 0.6931472
    %v1371 = vlog2.pop %v1200
    %v1372 = vmul.f32 %v1371, 0.6931472
    %v1373 = vlog2.pop %v1203
    %v1374 = vmul.f32 %v1373, 0.6931472
    %v1375 = vlog2.pop %v1206
    %v1376 = vmul.f32 %v1375, 0.6931472
    %v1377 = vlog2.pop %v1209
    %v1378 = vmul.f32 %v1377, 0.6931472
    %v1379 = vlog2.pop %v1212
    %v1380 = vmul.f32 %v1379, 0.6931472
    %v1381 = vlog2.pop %v1215
    %v1382 = vmul.f32 %v1381, 0.6931472
    %v1383 = vlog2.pop %v1218
    %v1384 = vmul.f32 %v1383, 0.6931472
    %v1385 = vlog2.pop %v1221
    %v1386 = vmul.f32 %v1385, 0.6931472
    %v1387 = vlog2.pop %v1224
    %v1388 = vmul.f32 %v1387, 0.6931472
    %v1389 = vlog2.pop %v1227
    %v1390 = vmul.f32 %v1389, 0.6931472
    %v1391 = vlog2.pop %v1230
    %v1392 = vmul.f32 %v1391, 0.6931472
    %v1393 = vlog2.pop %v1233
    %v1394 = vmul.f32 %v1393, 0.6931472
    %v1395 = vlog2.pop %v1236
    %v1396 = vmul.f32 %v1395, 0.6931472
    %v1397 = vlog2.pop %v1239
    %v1398 = vmul.f32 %v1397, 0.6931472
    %v1399 = vlog2.pop %v1242
    %v1400 = vmul.f32 %v1399, 0.6931472
    %v1401 = vlog2.pop %v1245
    %v1402 = vmul.f32 %v1401, 0.6931472
    %v1403 = vlog2.pop %v1248
    %v1404 = vmul.f32 %v1403, 0.6931472
    %v1405 = vlog2.pop %v1251
    %v1406 = vmul.f32 %v1405, 0.6931472
    %v1407 = vlog2.pop %v1254
    %v1408 = vmul.f32 %v1407, 0.6931472
    %v1409 = vlog2.pop %v1257
    %v1410 = vmul.f32 %v1409, 0.6931472
    %v1411 = vlog2.pop %v1260
    %v1412 = vmul.f32 %v1411, 0.6931472
    %v1413 = vlog2.pop %v1263
    %v1414 = vmul.f32 %v1413, 0.6931472
    %v1415 = vlog2.pop %v1266
    %v1416 = vmul.f32 %v1415, 0.6931472
    %v1417 = vlog2.pop %v1269
    %v1418 = vmul.f32 %v1417, 0.6931472
    %v1419 = vlog2.pop %v1272
    %v1420 = vmul.f32 %v1419, 0.6931472
    %v1421 = vlog2.pop %v1275
    %v1422 = vmul.f32 %v1421, 0.6931472
    %v1423 = vlog2.pop %v1278
    %v1424 = vmul.f32 %v1423, 0.6931472
    %v1425 = vlog2.pop %v1281
    %v1426 = vmul.f32 %v1425, 0.6931472
    %v1427 = vlog2.pop %v1284
    %v1428 = vmul.f32 %v1427, 0.6931472
    %v1429 = vlog2.pop %v1287
    %v1430 = vmul.f32 %v1429, 0.6931472
    %v1431 = vlog2.pop %v1290
    %v1432 = vmul.f32 %v1431, 0.6931472
    %v1433 = vlog2.pop %v1293
    %v1434 = vmul.f32 %v1433, 0.6931472
    %v1435 = vlog2.pop %v1296
    %v1436 = vmul.f32 %v1435, 0.6931472
    %v1437 = vlog2.pop %v1299
    %v1438 = vmul.f32 %v1437, 0.6931472
    %v1439 = vlog2.pop %v1302
    %v1440 = vmul.f32 %v1439, 0.6931472
    %v1441 = vlog2.pop %v1305
    %v1442 = vmul.f32 %v1441, 0.6931472
    %v1443 = vlog2.pop %v1308
    %v1444 = vmul.f32 %v1443, 0.6931472
    %v1445 = vlog2.pop %v1311
    %v1446 = vmul.f32 %v1445, 0.6931472
    %v1447 = vlog2.pop %v1314
    %v1448 = vmul.f32 %v1447, 0.6931472
    %v1449 = vlog2.pop %v1317
    %v1450 = vmul.f32 %v1449, 0.6931472
    %v1451 = vlog2.pop %v1320
    %v1452 = vmul.f32 %v1451, 0.6931472
    %v1453 = vlog2.pop %v1323
    %v1454 = vmul.f32 %v1453, 0.6931472
    %v1455 = vlog2.pop %v1326
    %v1456 = vmul.f32 %v1455, 0.6931472
    %v1457 = vlog2.pop %v1329
    %v1458 = vmul.f32 %v1457, 0.6931472
    %v1459 = vlog2.pop %v1332
    %v1460 = vmul.f32 %v1459, 0.6931472
    %v1461 = vlog2.pop %v1335
    %v1462 = vmul.f32 %v1461, 0.6931472
    %v1463 = vlog2.pop %v1338
    %v1464 = vmul.f32 %v1463, 0.6931472
    %v1465 = vadd.f32 %v774, %v1340
    %v1466 = vadd.f32 %v777, %v1342
    %v1467 = vadd.f32 %v780, %v1344
    %v1468 = vadd.f32 %v783, %v1346
    %v1469 = vadd.f32 %v786, %v1348
    %v1470 = vadd.f32 %v789, %v1350
    %v1471 = vadd.f32 %v792, %v1352
    %v1472 = vadd.f32 %v795, %v1354
    %v1473 = vadd.f32 %v798, %v1356
    %v1474 = vadd.f32 %v801, %v1358
    %v1475 = vadd.f32 %v804, %v1360
    %v1476 = vadd.f32 %v807, %v1362
    %v1477 = vadd.f32 %v810, %v1364
    %v1478 = vadd.f32 %v813, %v1366
    %v1479 = vadd.f32 %v816, %v1368
    %v1480 = vadd.f32 %v819, %v1370
    %v1481 = vadd.f32 %v822, %v1372
    %v1482 = vadd.f32 %v825, %v1374
    %v1483 = vadd.f32 %v828, %v1376
    %v1484 = vadd.f32 %v831, %v1378
    %v1485 = vadd.f32 %v834, %v1380
    %v1486 = vadd.f32 %v837, %v1382
    %v1487 = vadd.f32 %v840, %v1384
    %v1488 = vadd.f32 %v843, %v1386
    %v1489 = vadd.f32 %v846, %v1388
    %v1490 = vadd.f32 %v849, %v1390
    %v1491 = vadd.f32 %v852, %v1392
    %v1492 = vadd.f32 %v855, %v1394
    %v1493 = vadd.f32 %v858, %v1396
    %v1494 = vadd.f32 %v861, %v1398
    %v1495 = vadd.f32 %v864, %v1400
    %v1496 = vadd.f32 %v867, %v1402
    %v1497 = vadd.f32 %v870, %v1404
    %v1498 = vadd.f32 %v873, %v1406
    %v1499 = vadd.f32 %v876, %v1408
    %v1500 = vadd.f32 %v879, %v1410
    %v1501 = vadd.f32 %v882, %v1412
    %v1502 = vadd.f32 %v885, %v1414
    %v1503 = vadd.f32 %v888, %v1416
    %v1504 = vadd.f32 %v891, %v1418
    %v1505 = vadd.f32 %v894, %v1420
    %v1506 = vadd.f32 %v897, %v1422
    %v1507 = vadd.f32 %v900, %v1424
    %v1508 = vadd.f32 %v903, %v1426
    %v1509 = vadd.f32 %v906, %v1428
    %v1510 = vadd.f32 %v909, %v1430
    %v1511 = vadd.f32 %v912, %v1432
    %v1512 = vadd.f32 %v915, %v1434
    %v1513 = vadd.f32 %v918, %v1436
    %v1514 = vadd.f32 %v921, %v1438
    %v1515 = vadd.f32 %v924, %v1440
    %v1516 = vadd.f32 %v927, %v1442
    %v1517 = vadd.f32 %v930, %v1444
    %v1518 = vadd.f32 %v933, %v1446
    %v1519 = vadd.f32 %v936, %v1448
    %v1520 = vadd.f32 %v939, %v1450
    %v1521 = vadd.f32 %v942, %v1452
    %v1522 = vadd.f32 %v945, %v1454
    %v1523 = vadd.f32 %v948, %v1456
    %v1524 = vadd.f32 %v951, %v1458
    %v1525 = vadd.f32 %v954, %v1460
    %v1526 = vadd.f32 %v957, %v1462
    %v1527 = vadd.f32 %v960, %v1464
    %v1528 = vsel %vm709, %v1465, -1e+30
    %v1529 = vsel %vm710, %v1466, -1e+30
    %v1530 = vsel %vm711, %v1467, -1e+30
    %v1531 = vsel %vm712, %v1468, -1e+30
    %v1532 = vsel %vm713, %v1469, -1e+30
    %v1533 = vsel %vm714, %v1470, -1e+30
    %v1534 = vsel %vm715, %v1471, -1e+30
    %v1535 = vsel %vm716, %v1472, -1e+30
    %v1536 = vsel %vm717, %v1473, -1e+30
    %v1537 = vsel %vm718, %v1474, -1e+30
    %v1538 = vsel %vm719, %v1475, -1e+30
    %v1539 = vsel %vm720, %v1476, -1e+30
    %v1540 = vsel %vm721, %v1477, -1e+30
    %v1541 = vsel %vm722, %v1478, -1e+30
    %v1542 = vsel %vm723, %v1479, -1e+30
    %v1543 = vsel %vm724, %v1480, -1e+30
    %v1544 = vsel %vm725, %v1481, -1e+30
    %v1545 = vsel %vm726, %v1482, -1e+30
    %v1546 = vsel %vm727, %v1483, -1e+30
    %v1547 = vsel %vm728, %v1484, -1e+30
    %v1548 = vsel %vm729, %v1485, -1e+30
    %v1549 = vsel %vm730, %v1486, -1e+30
    %v1550 = vsel %vm731, %v1487, -1e+30
    %v1551 = vsel %vm732, %v1488, -1e+30
    %v1552 = vsel %vm733, %v1489, -1e+30
    %v1553 = vsel %vm734, %v1490, -1e+30
    %v1554 = vsel %vm735, %v1491, -1e+30
    %v1555 = vsel %vm736, %v1492, -1e+30
    %v1556 = vsel %vm737, %v1493, -1e+30
    %v1557 = vsel %vm738, %v1494, -1e+30
    %v1558 = vsel %vm739, %v1495, -1e+30
    %v1559 = vsel %vm740, %v1496, -1e+30
    %v1560 = vsel %vm741, %v1497, -1e+30
    %v1561 = vsel %vm742, %v1498, -1e+30
    %v1562 = vsel %vm743, %v1499, -1e+30
    %v1563 = vsel %vm744, %v1500, -1e+30
    %v1564 = vsel %vm745, %v1501, -1e+30
    %v1565 = vsel %vm746, %v1502, -1e+30
    %v1566 = vsel %vm747, %v1503, -1e+30
    %v1567 = vsel %vm748, %v1504, -1e+30
    %v1568 = vsel %vm749, %v1505, -1e+30
    %v1569 = vsel %vm750, %v1506, -1e+30
    %v1570 = vsel %vm751, %v1507, -1e+30
    %v1571 = vsel %vm752, %v1508, -1e+30
    %v1572 = vsel %vm753, %v1509, -1e+30
    %v1573 = vsel %vm754, %v1510, -1e+30
    %v1574 = vsel %vm755, %v1511, -1e+30
    %v1575 = vsel %vm756, %v1512, -1e+30
    %v1576 = vsel %vm757, %v1513, -1e+30
    %v1577 = vsel %vm758, %v1514, -1e+30
    %v1578 = vsel %vm759, %v1515, -1e+30
    %v1579 = vsel %vm760, %v1516, -1e+30
    %v1580 = vsel %vm761, %v1517, -1e+30
    %v1581 = vsel %vm762, %v1518, -1e+30
    %v1582 = vsel %vm763, %v1519, -1e+30
    %v1583 = vsel %vm764, %v1520, -1e+30
    %v1584 = vsel %vm765, %v1521, -1e+30
    %v1585 = vsel %vm766, %v1522, -1e+30
    %v1586 = vsel %vm767, %v1523, -1e+30
    %v1587 = vsel %vm768, %v1524, -1e+30
    %v1588 = vsel %vm769, %v1525, -1e+30
    %v1589 = vsel %vm770, %v1526, -1e+30
    %v1590 = vsel %vm771, %v1527, -1e+30
    %v1591 = vmax.f32 %v1528, %v1532
    %v1592 = vmax.f32 %v1529, %v1533
    %v1593 = vmax.f32 %v1530, %v1534
    %v1594 = vmax.f32 %v1531, %v1535
    %v1595 = vmax.f32 %v1591, %v1536
    %v1596 = vmax.f32 %v1592, %v1537
    %v1597 = vmax.f32 %v1593, %v1538
    %v1598 = vmax.f32 %v1594, %v1539
    %v1599 = vmax.f32 %v1595, %v1540
    %v1600 = vmax.f32 %v1596, %v1541
    %v1601 = vmax.f32 %v1597, %v1542
    %v1602 = vmax.f32 %v1598, %v1543
    %v1603 = vmax.f32 %v1599, %v1544
    %v1604 = vmax.f32 %v1600, %v1545
    %v1605 = vmax.f32 %v1601, %v1546
    %v1606 = vmax.f32 %v1602, %v1547
    %v1607 = vmax.f32 %v1603, %v1548
    %v1608 = vmax.f32 %v1604, %v1549
    %v1609 = vmax.f32 %v1605, %v1550
    %v1610 = vmax.f32 %v1606, %v1551
    %v1611 = vmax.f32 %v1607, %v1552
    %v1612 = vmax.f32 %v1608, %v1553
    %v1613 = vmax.f32 %v1609, %v1554
    %v1614 = vmax.f32 %v1610, %v1555
    %v1615 = vmax.f32 %v1611, %v1556
    %v1616 = vmax.f32 %v1612, %v1557
    %v1617 = vmax.f32 %v1613, %v1558
    %v1618 = vmax.f32 %v1614, %v1559
    %v1619 = vmax.f32 %v1615, %v1560
    %v1620 = vmax.f32 %v1616, %v1561
    %v1621 = vmax.f32 %v1617, %v1562
    %v1622 = vmax.f32 %v1618, %v1563
    %v1623 = vmax.f32 %v1619, %v1564
    %v1624 = vmax.f32 %v1620, %v1565
    %v1625 = vmax.f32 %v1621, %v1566
    %v1626 = vmax.f32 %v1622, %v1567
    %v1627 = vmax.f32 %v1623, %v1568
    %v1628 = vmax.f32 %v1624, %v1569
    %v1629 = vmax.f32 %v1625, %v1570
    %v1630 = vmax.f32 %v1626, %v1571
    %v1631 = vmax.f32 %v1627, %v1572
    %v1632 = vmax.f32 %v1628, %v1573
    %v1633 = vmax.f32 %v1629, %v1574
    %v1634 = vmax.f32 %v1630, %v1575
    %v1635 = vmax.f32 %v1631, %v1576
    %v1636 = vmax.f32 %v1632, %v1577
    %v1637 = vmax.f32 %v1633, %v1578
    %v1638 = vmax.f32 %v1634, %v1579
    %v1639 = vmax.f32 %v1635, %v1580
    %v1640 = vmax.f32 %v1636, %v1581
    %v1641 = vmax.f32 %v1637, %v1582
    %v1642 = vmax.f32 %v1638, %v1583
    %v1643 = vmax.f32 %v1639, %v1584
    %v1644 = vmax.f32 %v1640, %v1585
    %v1645 = vmax.f32 %v1641, %v1586
    %v1646 = vmax.f32 %v1642, %v1587
    %v1647 = vmax.f32 %v1643, %v1588
    %v1648 = vmax.f32 %v1644, %v1589
    %v1649 = vmax.f32 %v1645, %v1590
    %v1650 = vmax.f32 %v1647, %v1648
    %v1651 = vmax.f32 %v1649, %v1646
    %v1652 = vmax.f32 %v1650, %v1651
    %v1653 = vrot.slane %v1652, 4
    %v1654 = vmax.f32 %v1652, %v1653
    %v1655 = vrot.slane %v1654, 2
    %v1656 = vmax.f32 %v1654, %v1655
    %v1657 = vrot.slane %v1656, 1
    %v1658 = vmax.f32 %v1656, %v1657
    %v1659 = vsub.f32 %v1528, %v1658
    %v1660 = vsub.f32 %v1529, %v1658
    %v1661 = vsub.f32 %v1530, %v1658
    %v1662 = vsub.f32 %v1531, %v1658
    %v1663 = vsub.f32 %v1532, %v1658
    %v1664 = vsub.f32 %v1533, %v1658
    %v1665 = vsub.f32 %v1534, %v1658
    %v1666 = vsub.f32 %v1535, %v1658
    %v1667 = vsub.f32 %v1536, %v1658
    %v1668 = vsub.f32 %v1537, %v1658
    %v1669 = vsub.f32 %v1538, %v1658
    %v1670 = vsub.f32 %v1539, %v1658
    %v1671 = vsub.f32 %v1540, %v1658
    %v1672 = vsub.f32 %v1541, %v1658
    %v1673 = vsub.f32 %v1542, %v1658
    %v1674 = vsub.f32 %v1543, %v1658
    %v1675 = vsub.f32 %v1544, %v1658
    %v1676 = vsub.f32 %v1545, %v1658
    %v1677 = vsub.f32 %v1546, %v1658
    %v1678 = vsub.f32 %v1547, %v1658
    %v1679 = vsub.f32 %v1548, %v1658
    %v1680 = vsub.f32 %v1549, %v1658
    %v1681 = vsub.f32 %v1550, %v1658
    %v1682 = vsub.f32 %v1551, %v1658
    %v1683 = vsub.f32 %v1552, %v1658
    %v1684 = vsub.f32 %v1553, %v1658
    %v1685 = vsub.f32 %v1554, %v1658
    %v1686 = vsub.f32 %v1555, %v1658
    %v1687 = vsub.f32 %v1556, %v1658
    %v1688 = vsub.f32 %v1557, %v1658
    %v1689 = vsub.f32 %v1558, %v1658
    %v1690 = vsub.f32 %v1559, %v1658
    %v1691 = vsub.f32 %v1560, %v1658
    %v1692 = vsub.f32 %v1561, %v1658
    %v1693 = vsub.f32 %v1562, %v1658
    %v1694 = vsub.f32 %v1563, %v1658
    %v1695 = vsub.f32 %v1564, %v1658
    %v1696 = vsub.f32 %v1565, %v1658
    %v1697 = vsub.f32 %v1566, %v1658
    %v1698 = vsub.f32 %v1567, %v1658
    %v1699 = vsub.f32 %v1568, %v1658
    %v1700 = vsub.f32 %v1569, %v1658
    %v1701 = vsub.f32 %v1570, %v1658
    %v1702 = vsub.f32 %v1571, %v1658
    %v1703 = vsub.f32 %v1572, %v1658
    %v1704 = vsub.f32 %v1573, %v1658
    %v1705 = vsub.f32 %v1574, %v1658
    %v1706 = vsub.f32 %v1575, %v1658
    %v1707 = vsub.f32 %v1576, %v1658
    %v1708 = vsub.f32 %v1577, %v1658
    %v1709 = vsub.f32 %v1578, %v1658
    %v1710 = vsub.f32 %v1579, %v1658
    %v1711 = vsub.f32 %v1580, %v1658
    %v1712 = vsub.f32 %v1581, %v1658
    %v1713 = vsub.f32 %v1582, %v1658
    %v1714 = vsub.f32 %v1583, %v1658
    %v1715 = vsub.f32 %v1584, %v1658
    %v1716 = vsub.f32 %v1585, %v1658
    %v1717 = vsub.f32 %v1586, %v1658
    %v1718 = vsub.f32 %v1587, %v1658
    %v1719 = vsub.f32 %v1588, %v1658
    %v1720 = vsub.f32 %v1589, %v1658
    %v1721 = vsub.f32 %v1590, %v1658
    %v1722 = vmul.f32 %v1659, 1.442695
    %v1723 = vpow.pop %v1722
    %v1724 = vmul.f32 %v1660, 1.442695
    %v1725 = vpow.pop %v1724
    %v1726 = vmul.f32 %v1661, 1.442695
    %v1727 = vpow.pop %v1726
    %v1728 = vmul.f32 %v1662, 1.442695
    %v1729 = vpow.pop %v1728
    %v1730 = vmul.f32 %v1663, 1.442695
    %v1731 = vpow.pop %v1730
    %v1732 = vmul.f32 %v1664, 1.442695
    %v1733 = vpow.pop %v1732
    %v1734 = vmul.f32 %v1665, 1.442695
    %v1735 = vpow.pop %v1734
    %v1736 = vmul.f32 %v1666, 1.442695
    %v1737 = vpow.pop %v1736
    %v1738 = vmul.f32 %v1667, 1.442695
    %v1739 = vpow.pop %v1738
    %v1740 = vmul.f32 %v1668, 1.442695
    %v1741 = vpow.pop %v1740
    %v1742 = vmul.f32 %v1669, 1.442695
    %v1743 = vpow.pop %v1742
    %v1744 = vmul.f32 %v1670, 1.442695
    %v1745 = vpow.pop %v1744
    %v1746 = vmul.f32 %v1671, 1.442695
    %v1747 = vpow.pop %v1746
    %v1748 = vmul.f32 %v1672, 1.442695
    %v1749 = vpow.pop %v1748
    %v1750 = vmul.f32 %v1673, 1.442695
    %v1751 = vpow.pop %v1750
    %v1752 = vmul.f32 %v1674, 1.442695
    %v1753 = vpow.pop %v1752
    %v1754 = vmul.f32 %v1675, 1.442695
    %v1755 = vpow.pop %v1754
    %v1756 = vmul.f32 %v1676, 1.442695
    %v1757 = vpow.pop %v1756
    %v1758 = vmul.f32 %v1677, 1.442695
    %v1759 = vpow.pop %v1758
    %v1760 = vmul.f32 %v1678, 1.442695
    %v1761 = vpow.pop %v1760
    %v1762 = vmul.f32 %v1679, 1.442695
    %v1763 = vpow.pop %v1762
    %v1764 = vmul.f32 %v1680, 1.442695
    %v1765 = vpow.pop %v1764
    %v1766 = vmul.f32 %v1681, 1.442695
    %v1767 = vpow.pop %v1766
    %v1768 = vmul.f32 %v1682, 1.442695
    %v1769 = vpow.pop %v1768
    %v1770 = vmul.f32 %v1683, 1.442695
    %v1771 = vpow.pop %v1770
    %v1772 = vmul.f32 %v1684, 1.442695
    %v1773 = vpow.pop %v1772
    %v1774 = vmul.f32 %v1685, 1.442695
    %v1775 = vpow.pop %v1774
    %v1776 = vmul.f32 %v1686, 1.442695
    %v1777 = vpow.pop %v1776
    %v1778 = vmul.f32 %v1687, 1.442695
    %v1779 = vpow.pop %v1778
    %v1780 = vmul.f32 %v1688, 1.442695
    %v1781 = vpow.pop %v1780
    %v1782 = vmul.f32 %v1689, 1.442695
    %v1783 = vpow.pop %v1782
    %v1784 = vmul.f32 %v1690, 1.442695
    %v1785 = vpow.pop %v1784
    %v1786 = vmul.f32 %v1691, 1.442695
    %v1787 = vpow.pop %v1786
    %v1788 = vmul.f32 %v1692, 1.442695
    %v1789 = vpow.pop %v1788
    %v1790 = vmul.f32 %v1693, 1.442695
    %v1791 = vpow.pop %v1790
    %v1792 = vmul.f32 %v1694, 1.442695
    %v1793 = vpow.pop %v1792
    %v1794 = vmul.f32 %v1695, 1.442695
    %v1795 = vpow.pop %v1794
    %v1796 = vmul.f32 %v1696, 1.442695
    %v1797 = vpow.pop %v1796
    %v1798 = vmul.f32 %v1697, 1.442695
    %v1799 = vpow.pop %v1798
    %v1800 = vmul.f32 %v1698, 1.442695
    %v1801 = vpow.pop %v1800
    %v1802 = vmul.f32 %v1699, 1.442695
    %v1803 = vpow.pop %v1802
    %v1804 = vmul.f32 %v1700, 1.442695
    %v1805 = vpow.pop %v1804
    %v1806 = vmul.f32 %v1701, 1.442695
    %v1807 = vpow.pop %v1806
    %v1808 = vmul.f32 %v1702, 1.442695
    %v1809 = vpow.pop %v1808
    %v1810 = vmul.f32 %v1703, 1.442695
    %v1811 = vpow.pop %v1810
    %v1812 = vmul.f32 %v1704, 1.442695
    %v1813 = vpow.pop %v1812
    %v1814 = vmul.f32 %v1705, 1.442695
    %v1815 = vpow.pop %v1814
    %v1816 = vmul.f32 %v1706, 1.442695
    %v1817 = vpow.pop %v1816
    %v1818 = vmul.f32 %v1707, 1.442695
    %v1819 = vpow.pop %v1818
    %v1820 = vmul.f32 %v1708, 1.442695
    %v1821 = vpow.pop %v1820
    %v1822 = vmul.f32 %v1709, 1.442695
    %v1823 = vpow.pop %v1822
    %v1824 = vmul.f32 %v1710, 1.442695
    %v1825 = vpow.pop %v1824
    %v1826 = vmul.f32 %v1711, 1.442695
    %v1827 = vpow.pop %v1826
    %v1828 = vmul.f32 %v1712, 1.442695
    %v1829 = vpow.pop %v1828
    %v1830 = vmul.f32 %v1713, 1.442695
    %v1831 = vpow.pop %v1830
    %v1832 = vmul.f32 %v1714, 1.442695
    %v1833 = vpow.pop %v1832
    %v1834 = vmul.f32 %v1715, 1.442695
    %v1835 = vpow.pop %v1834
    %v1836 = vmul.f32 %v1716, 1.442695
    %v1837 = vpow.pop %v1836
    %v1838 = vmul.f32 %v1717, 1.442695
    %v1839 = vpow.pop %v1838
    %v1840 = vmul.f32 %v1718, 1.442695
    %v1841 = vpow.pop %v1840
    %v1842 = vmul.f32 %v1719, 1.442695
    %v1843 = vpow.pop %v1842
    %v1844 = vmul.f32 %v1720, 1.442695
    %v1845 = vpow.pop %v1844
    %v1846 = vmul.f32 %v1721, 1.442695
    %v1847 = vpow.pop %v1846
    %v1848 = vsel %vm709, %v1723, 0.0
    %v1849 = vsel %vm710, %v1725, 0.0
    %v1850 = vsel %vm711, %v1727, 0.0
    %v1851 = vsel %vm712, %v1729, 0.0
    %v1852 = vsel %vm713, %v1731, 0.0
    %v1853 = vsel %vm714, %v1733, 0.0
    %v1854 = vsel %vm715, %v1735, 0.0
    %v1855 = vsel %vm716, %v1737, 0.0
    %v1856 = vsel %vm717, %v1739, 0.0
    %v1857 = vsel %vm718, %v1741, 0.0
    %v1858 = vsel %vm719, %v1743, 0.0
    %v1859 = vsel %vm720, %v1745, 0.0
    %v1860 = vsel %vm721, %v1747, 0.0
    %v1861 = vsel %vm722, %v1749, 0.0
    %v1862 = vsel %vm723, %v1751, 0.0
    %v1863 = vsel %vm724, %v1753, 0.0
    %v1864 = vsel %vm725, %v1755, 0.0
    %v1865 = vsel %vm726, %v1757, 0.0
    %v1866 = vsel %vm727, %v1759, 0.0
    %v1867 = vsel %vm728, %v1761, 0.0
    %v1868 = vsel %vm729, %v1763, 0.0
    %v1869 = vsel %vm730, %v1765, 0.0
    %v1870 = vsel %vm731, %v1767, 0.0
    %v1871 = vsel %vm732, %v1769, 0.0
    %v1872 = vsel %vm733, %v1771, 0.0
    %v1873 = vsel %vm734, %v1773, 0.0
    %v1874 = vsel %vm735, %v1775, 0.0
    %v1875 = vsel %vm736, %v1777, 0.0
    %v1876 = vsel %vm737, %v1779, 0.0
    %v1877 = vsel %vm738, %v1781, 0.0
    %v1878 = vsel %vm739, %v1783, 0.0
    %v1879 = vsel %vm740, %v1785, 0.0
    %v1880 = vsel %vm741, %v1787, 0.0
    %v1881 = vsel %vm742, %v1789, 0.0
    %v1882 = vsel %vm743, %v1791, 0.0
    %v1883 = vsel %vm744, %v1793, 0.0
    %v1884 = vsel %vm745, %v1795, 0.0
    %v1885 = vsel %vm746, %v1797, 0.0
    %v1886 = vsel %vm747, %v1799, 0.0
    %v1887 = vsel %vm748, %v1801, 0.0
    %v1888 = vsel %vm749, %v1803, 0.0
    %v1889 = vsel %vm750, %v1805, 0.0
    %v1890 = vsel %vm751, %v1807, 0.0
    %v1891 = vsel %vm752, %v1809, 0.0
    %v1892 = vsel %vm753, %v1811, 0.0
    %v1893 = vsel %vm754, %v1813, 0.0
    %v1894 = vsel %vm755, %v1815, 0.0
    %v1895 = vsel %vm756, %v1817, 0.0
    %v1896 = vsel %vm757, %v1819, 0.0
    %v1897 = vsel %vm758, %v1821, 0.0
    %v1898 = vsel %vm759, %v1823, 0.0
    %v1899 = vsel %vm760, %v1825, 0.0
    %v1900 = vsel %vm761, %v1827, 0.0
    %v1901 = vsel %vm762, %v1829, 0.0
    %v1902 = vsel %vm763, %v1831, 0.0
    %v1903 = vsel %vm764, %v1833, 0.0
    %v1904 = vsel %vm765, %v1835, 0.0
    %v1905 = vsel %vm766, %v1837, 0.0
    %v1906 = vsel %vm767, %v1839, 0.0
    %v1907 = vsel %vm768, %v1841, 0.0
    %v1908 = vsel %vm769, %v1843, 0.0
    %v1909 = vsel %vm770, %v1845, 0.0
    %v1910 = vsel %vm771, %v1847, 0.0
    %v1911 = vadd.f32 %v1848, %v1849
    %v1912 = vadd.f32 %v1911, %v1850
    %v1913 = vadd.f32 %v1912, %v1851
    %v1914 = vadd.f32 %v1913, %v1852
    %v1915 = vadd.f32 %v1914, %v1853
    %v1916 = vadd.f32 %v1915, %v1854
    %v1917 = vadd.f32 %v1916, %v1855
    %v1918 = vadd.f32 %v1917, %v1856
    %v1919 = vadd.f32 %v1918, %v1857
    %v1920 = vadd.f32 %v1919, %v1858
    %v1921 = vadd.f32 %v1920, %v1859
    %v1922 = vadd.f32 %v1921, %v1860
    %v1923 = vadd.f32 %v1922, %v1861
    %v1924 = vadd.f32 %v1923, %v1862
    %v1925 = vadd.f32 %v1924, %v1863
    %v1926 = vadd.f32 %v1925, %v1864
    %v1927 = vadd.f32 %v1926, %v1865
    %v1928 = vadd.f32 %v1927, %v1866
    %v1929 = vadd.f32 %v1928, %v1867
    %v1930 = vadd.f32 %v1929, %v1868
    %v1931 = vadd.f32 %v1930, %v1869
    %v1932 = vadd.f32 %v1931, %v1870
    %v1933 = vadd.f32 %v1932, %v1871
    %v1934 = vadd.f32 %v1933, %v1872
    %v1935 = vadd.f32 %v1934, %v1873
    %v1936 = vadd.f32 %v1935, %v1874
    %v1937 = vadd.f32 %v1936, %v1875
    %v1938 = vadd.f32 %v1937, %v1876
    %v1939 = vadd.f32 %v1938, %v1877
    %v1940 = vadd.f32 %v1939, %v1878
    %v1941 = vadd.f32 %v1940, %v1879
    %v1942 = vadd.f32 %v1941, %v1880
    %v1943 = vadd.f32 %v1942, %v1881
    %v1944 = vadd.f32 %v1943, %v1882
    %v1945 = vadd.f32 %v1944, %v1883
    %v1946 = vadd.f32 %v1945, %v1884
    %v1947 = vadd.f32 %v1946, %v1885
    %v1948 = vadd.f32 %v1947, %v1886
    %v1949 = vadd.f32 %v1948, %v1887
    %v1950 = vadd.f32 %v1949, %v1888
    %v1951 = vadd.f32 %v1950, %v1889
    %v1952 = vadd.f32 %v1951, %v1890
    %v1953 = vadd.f32 %v1952, %v1891
    %v1954 = vadd.f32 %v1953, %v1892
    %v1955 = vadd.f32 %v1954, %v1893
    %v1956 = vadd.f32 %v1955, %v1894
    %v1957 = vadd.f32 %v1956, %v1895
    %v1958 = vadd.f32 %v1957, %v1896
    %v1959 = vadd.f32 %v1958, %v1897
    %v1960 = vadd.f32 %v1959, %v1898
    %v1961 = vadd.f32 %v1960, %v1899
    %v1962 = vadd.f32 %v1961, %v1900
    %v1963 = vadd.f32 %v1962, %v1901
    %v1964 = vadd.f32 %v1963, %v1902
    %v1965 = vadd.f32 %v1964, %v1903
    %v1966 = vadd.f32 %v1965, %v1904
    %v1967 = vadd.f32 %v1966, %v1905
    %v1968 = vadd.f32 %v1967, %v1906
    %v1969 = vadd.f32 %v1968, %v1907
    %v1970 = vadd.f32 %v1969, %v1908
    %v1971 = vadd.f32 %v1970, %v1909
    %v1972 = vadd.f32 %v1971, %v1910
    %v1973 = vrot.slane %v1972, 4
    %v1974 = vadd.f32 %v1972, %v1973
    %v1975 = vrot.slane %v1974, 2
    %v1976 = vadd.f32 %v1974, %v1975
    %v1977 = vrot.slane %v1976, 1
    %v1978 = vadd.f32 %v1976, %v1977
    %v1979 = vrcp.pop %v1978
    %v1980 = vmul.f32 %v1978, %v1979
    %v1981 = vsub.f32 2.0, %v1980
    %v1982 = vmul.f32 %v1979, %v1981
    %v1983 = vmul.f32 %v1848, %v1982
    %v1984 = vmul.f32 %v1849, %v1982
    %v1985 = vmul.f32 %v1850, %v1982
    %v1986 = vmul.f32 %v1851, %v1982
    %v1987 = vmul.f32 %v1852, %v1982
    %v1988 = vmul.f32 %v1853, %v1982
    %v1989 = vmul.f32 %v1854, %v1982
    %v1990 = vmul.f32 %v1855, %v1982
    %v1991 = vmul.f32 %v1856, %v1982
    %v1992 = vmul.f32 %v1857, %v1982
    %v1993 = vmul.f32 %v1858, %v1982
    %v1994 = vmul.f32 %v1859, %v1982
    %v1995 = vmul.f32 %v1860, %v1982
    %v1996 = vmul.f32 %v1861, %v1982
    %v1997 = vmul.f32 %v1862, %v1982
    %v1998 = vmul.f32 %v1863, %v1982
    %v1999 = vmul.f32 %v1864, %v1982
    %v2000 = vmul.f32 %v1865, %v1982
    %v2001 = vmul.f32 %v1866, %v1982
    %v2002 = vmul.f32 %v1867, %v1982
    %v2003 = vmul.f32 %v1868, %v1982
    %v2004 = vmul.f32 %v1869, %v1982
    %v2005 = vmul.f32 %v1870, %v1982
    %v2006 = vmul.f32 %v1871, %v1982
    %v2007 = vmul.f32 %v1872, %v1982
    %v2008 = vmul.f32 %v1873, %v1982
    %v2009 = vmul.f32 %v1874, %v1982
    %v2010 = vmul.f32 %v1875, %v1982
    %v2011 = vmul.f32 %v1876, %v1982
    %v2012 = vmul.f32 %v1877, %v1982
    %v2013 = vmul.f32 %v1878, %v1982
    %v2014 = vmul.f32 %v1879, %v1982
    %v2015 = vmul.f32 %v1880, %v1982
    %v2016 = vmul.f32 %v1881, %v1982
    %v2017 = vmul.f32 %v1882, %v1982
    %v2018 = vmul.f32 %v1883, %v1982
    %v2019 = vmul.f32 %v1884, %v1982
    %v2020 = vmul.f32 %v1885, %v1982
    %v2021 = vmul.f32 %v1886, %v1982
    %v2022 = vmul.f32 %v1887, %v1982
    %v2023 = vmul.f32 %v1888, %v1982
    %v2024 = vmul.f32 %v1889, %v1982
    %v2025 = vmul.f32 %v1890, %v1982
    %v2026 = vmul.f32 %v1891, %v1982
    %v2027 = vmul.f32 %v1892, %v1982
    %v2028 = vmul.f32 %v1893, %v1982
    %v2029 = vmul.f32 %v1894, %v1982
    %v2030 = vmul.f32 %v1895, %v1982
    %v2031 = vmul.f32 %v1896, %v1982
    %v2032 = vmul.f32 %v1897, %v1982
    %v2033 = vmul.f32 %v1898, %v1982
    %v2034 = vmul.f32 %v1899, %v1982
    %v2035 = vmul.f32 %v1900, %v1982
    %v2036 = vmul.f32 %v1901, %v1982
    %v2037 = vmul.f32 %v1902, %v1982
    %v2038 = vmul.f32 %v1903, %v1982
    %v2039 = vmul.f32 %v1904, %v1982
    %v2040 = vmul.f32 %v1905, %v1982
    %v2041 = vmul.f32 %v1906, %v1982
    %v2042 = vmul.f32 %v1907, %v1982
    %v2043 = vmul.f32 %v1908, %v1982
    %v2044 = vmul.f32 %v1909, %v1982
    %v2045 = vmul.f32 %v1910, %v1982
    %vm2046 = vcmask 7168
    %2047 = vst.msk [vmem:[%s6] sm:$0xff] %vm2046, %v1983
    %2048 = vst.msk [vmem:[%s6 + $0x8] sm:$0xff] %vm2046, %v1984
    %2049 = vst.msk [vmem:[%s6 + $0x10] sm:$0xff] %vm2046, %v1985
    %2050 = vst.msk [vmem:[%s6 + $0x18] sm:$0xff] %vm2046, %v1986
    %2051 = vst.msk [vmem:[%s6 + $0x20] sm:$0xff] %vm2046, %v1987
    %2052 = vst.msk [vmem:[%s6 + $0x28] sm:$0xff] %vm2046, %v1988
    %2053 = vst.msk [vmem:[%s6 + $0x30] sm:$0xff] %vm2046, %v1989
    %2054 = vst.msk [vmem:[%s6 + $0x38] sm:$0xff] %vm2046, %v1990
    %2055 = vst.msk [vmem:[%s6 + $0x40] sm:$0xff] %vm2046, %v1991
    %2056 = vst.msk [vmem:[%s6 + $0x48] sm:$0xff] %vm2046, %v1992
    %2057 = vst.msk [vmem:[%s6 + $0x50] sm:$0xff] %vm2046, %v1993
    %2058 = vst.msk [vmem:[%s6 + $0x58] sm:$0xff] %vm2046, %v1994
    %2059 = vst.msk [vmem:[%s6 + $0x60] sm:$0xff] %vm2046, %v1995
    %2060 = vst.msk [vmem:[%s6 + $0x68] sm:$0xff] %vm2046, %v1996
    %2061 = vst.msk [vmem:[%s6 + $0x70] sm:$0xff] %vm2046, %v1997
    %2062 = vst.msk [vmem:[%s6 + $0x78] sm:$0xff] %vm2046, %v1998
    %2063 = vst.msk [vmem:[%s6 + $0x80] sm:$0xff] %vm2046, %v1999
    %2064 = vst.msk [vmem:[%s6 + $0x88] sm:$0xff] %vm2046, %v2000
    %2065 = vst.msk [vmem:[%s6 + $0x90] sm:$0xff] %vm2046, %v2001
    %2066 = vst.msk [vmem:[%s6 + $0x98] sm:$0xff] %vm2046, %v2002
    %2067 = vst.msk [vmem:[%s6 + $0xa0] sm:$0xff] %vm2046, %v2003
    %2068 = vst.msk [vmem:[%s6 + $0xa8] sm:$0xff] %vm2046, %v2004
    %2069 = vst.msk [vmem:[%s6 + $0xb0] sm:$0xff] %vm2046, %v2005
    %2070 = vst.msk [vmem:[%s6 + $0xb8] sm:$0xff] %vm2046, %v2006
    %2071 = vst.msk [vmem:[%s6 + $0xc0] sm:$0xff] %vm2046, %v2007
    %2072 = vst.msk [vmem:[%s6 + $0xc8] sm:$0xff] %vm2046, %v2008
    %2073 = vst.msk [vmem:[%s6 + $0xd0] sm:$0xff] %vm2046, %v2009
    %2074 = vst.msk [vmem:[%s6 + $0xd8] sm:$0xff] %vm2046, %v2010
    %2075 = vst.msk [vmem:[%s6 + $0xe0] sm:$0xff] %vm2046, %v2011
    %2076 = vst.msk [vmem:[%s6 + $0xe8] sm:$0xff] %vm2046, %v2012
    %2077 = vst.msk [vmem:[%s6 + $0xf0] sm:$0xff] %vm2046, %v2013
    %2078 = vst.msk [vmem:[%s6 + $0xf8] sm:$0xff] %vm2046, %v2014
    %2079 = vst.msk [vmem:[%s6 + $0x100] sm:$0xff] %vm2046, %v2015
    %2080 = vst.msk [vmem:[%s6 + $0x108] sm:$0xff] %vm2046, %v2016
    %2081 = vst.msk [vmem:[%s6 + $0x110] sm:$0xff] %vm2046, %v2017
    %2082 = vst.msk [vmem:[%s6 + $0x118] sm:$0xff] %vm2046, %v2018
    %2083 = vst.msk [vmem:[%s6 + $0x120] sm:$0xff] %vm2046, %v2019
    %2084 = vst.msk [vmem:[%s6 + $0x128] sm:$0xff] %vm2046, %v2020
    %2085 = vst.msk [vmem:[%s6 + $0x130] sm:$0xff] %vm2046, %v2021
    %2086 = vst.msk [vmem:[%s6 + $0x138] sm:$0xff] %vm2046, %v2022
    %2087 = vst.msk [vmem:[%s6 + $0x140] sm:$0xff] %vm2046, %v2023
    %2088 = vst.msk [vmem:[%s6 + $0x148] sm:$0xff] %vm2046, %v2024
    %2089 = vst.msk [vmem:[%s6 + $0x150] sm:$0xff] %vm2046, %v2025
    %2090 = vst.msk [vmem:[%s6 + $0x158] sm:$0xff] %vm2046, %v2026
    %2091 = vst.msk [vmem:[%s6 + $0x160] sm:$0xff] %vm2046, %v2027
    %2092 = vst.msk [vmem:[%s6 + $0x168] sm:$0xff] %vm2046, %v2028
    %2093 = vst.msk [vmem:[%s6 + $0x170] sm:$0xff] %vm2046, %v2029
    %2094 = vst.msk [vmem:[%s6 + $0x178] sm:$0xff] %vm2046, %v2030
    %2095 = vst.msk [vmem:[%s6 + $0x180] sm:$0xff] %vm2046, %v2031
    %2096 = vst.msk [vmem:[%s6 + $0x188] sm:$0xff] %vm2046, %v2032
    %2097 = vst.msk [vmem:[%s6 + $0x190] sm:$0xff] %vm2046, %v2033
    %2098 = vst.msk [vmem:[%s6 + $0x198] sm:$0xff] %vm2046, %v2034
    %2099 = vst.msk [vmem:[%s6 + $0x1a0] sm:$0xff] %vm2046, %v2035
    %2100 = vst.msk [vmem:[%s6 + $0x1a8] sm:$0xff] %vm2046, %v2036
    %2101 = vst.msk [vmem:[%s6 + $0x1b0] sm:$0xff] %vm2046, %v2037
    %2102 = vst.msk [vmem:[%s6 + $0x1b8] sm:$0xff] %vm2046, %v2038
    %2103 = vst.msk [vmem:[%s6 + $0x1c0] sm:$0xff] %vm2046, %v2039
    %2104 = vst.msk [vmem:[%s6 + $0x1c8] sm:$0xff] %vm2046, %v2040
    %2105 = vst.msk [vmem:[%s6 + $0x1d0] sm:$0xff] %vm2046, %v2041
    %2106 = vst.msk [vmem:[%s6 + $0x1d8] sm:$0xff] %vm2046, %v2042
    %2107 = vst.msk [vmem:[%s6 + $0x1e0] sm:$0xff] %vm2046, %v2043
    %2108 = vst.msk [vmem:[%s6 + $0x1e8] sm:$0xff] %vm2046, %v2044
    %2109 = vst.msk [vmem:[%s6 + $0x1f0] sm:$0xff] %vm2046, %v2045
    %s2110 = scvt.s32.f32 %s34
    %v2111 = vstv %s2110
    %v2112 = vmul.f32 %v1983, %v2111
    %v2113 = vmul.f32 %v1984, %v2111
    %v2114 = vmul.f32 %v1985, %v2111
    %v2115 = vmul.f32 %v1986, %v2111
    %v2116 = vmul.f32 %v1987, %v2111
    %v2117 = vmul.f32 %v1988, %v2111
    %v2118 = vmul.f32 %v1989, %v2111
    %v2119 = vmul.f32 %v1990, %v2111
    %v2120 = vmul.f32 %v1991, %v2111
    %v2121 = vmul.f32 %v1992, %v2111
    %v2122 = vmul.f32 %v1993, %v2111
    %v2123 = vmul.f32 %v1994, %v2111
    %v2124 = vmul.f32 %v1995, %v2111
    %v2125 = vmul.f32 %v1996, %v2111
    %v2126 = vmul.f32 %v1997, %v2111
    %v2127 = vmul.f32 %v1998, %v2111
    %v2128 = vmul.f32 %v1999, %v2111
    %v2129 = vmul.f32 %v2000, %v2111
    %v2130 = vmul.f32 %v2001, %v2111
    %v2131 = vmul.f32 %v2002, %v2111
    %v2132 = vmul.f32 %v2003, %v2111
    %v2133 = vmul.f32 %v2004, %v2111
    %v2134 = vmul.f32 %v2005, %v2111
    %v2135 = vmul.f32 %v2006, %v2111
    %v2136 = vmul.f32 %v2007, %v2111
    %v2137 = vmul.f32 %v2008, %v2111
    %v2138 = vmul.f32 %v2009, %v2111
    %v2139 = vmul.f32 %v2010, %v2111
    %v2140 = vmul.f32 %v2011, %v2111
    %v2141 = vmul.f32 %v2012, %v2111
    %v2142 = vmul.f32 %v2013, %v2111
    %v2143 = vmul.f32 %v2014, %v2111
    %v2144 = vmul.f32 %v2015, %v2111
    %v2145 = vmul.f32 %v2016, %v2111
    %v2146 = vmul.f32 %v2017, %v2111
    %v2147 = vmul.f32 %v2018, %v2111
    %v2148 = vmul.f32 %v2019, %v2111
    %v2149 = vmul.f32 %v2020, %v2111
    %v2150 = vmul.f32 %v2021, %v2111
    %v2151 = vmul.f32 %v2022, %v2111
    %v2152 = vmul.f32 %v2023, %v2111
    %v2153 = vmul.f32 %v2024, %v2111
    %v2154 = vmul.f32 %v2025, %v2111
    %v2155 = vmul.f32 %v2026, %v2111
    %v2156 = vmul.f32 %v2027, %v2111
    %v2157 = vmul.f32 %v2028, %v2111
    %v2158 = vmul.f32 %v2029, %v2111
    %v2159 = vmul.f32 %v2030, %v2111
    %v2160 = vmul.f32 %v2031, %v2111
    %v2161 = vmul.f32 %v2032, %v2111
    %v2162 = vmul.f32 %v2033, %v2111
    %v2163 = vmul.f32 %v2034, %v2111
    %v2164 = vmul.f32 %v2035, %v2111
    %v2165 = vmul.f32 %v2036, %v2111
    %v2166 = vmul.f32 %v2037, %v2111
    %v2167 = vmul.f32 %v2038, %v2111
    %v2168 = vmul.f32 %v2039, %v2111
    %v2169 = vmul.f32 %v2040, %v2111
    %v2170 = vmul.f32 %v2041, %v2111
    %v2171 = vmul.f32 %v2042, %v2111
    %v2172 = vmul.f32 %v2043, %v2111
    %v2173 = vmul.f32 %v2044, %v2111
    %v2174 = vmul.f32 %v2045, %v2111
    %v2175 = vmul.f32 %v35, %v2112
    %v2176 = vmul.f32 %v36, %v2112
    %v2177 = vmul.f32 %v37, %v2113
    %v2178 = vmul.f32 %v38, %v2113
    %v2179 = vmul.f32 %v39, %v2114
    %v2180 = vmul.f32 %v40, %v2114
    %v2181 = vmul.f32 %v41, %v2115
    %v2182 = vmul.f32 %v42, %v2115
    %v2183 = vmul.f32 %v43, %v2116
    %v2184 = vmul.f32 %v44, %v2116
    %v2185 = vmul.f32 %v45, %v2117
    %v2186 = vmul.f32 %v46, %v2117
    %v2187 = vmul.f32 %v47, %v2118
    %v2188 = vmul.f32 %v48, %v2118
    %v2189 = vmul.f32 %v49, %v2119
    %v2190 = vmul.f32 %v50, %v2119
    %v2191 = vmul.f32 %v51, %v2120
    %v2192 = vmul.f32 %v52, %v2120
    %v2193 = vmul.f32 %v53, %v2121
    %v2194 = vmul.f32 %v54, %v2121
    %v2195 = vmul.f32 %v55, %v2122
    %v2196 = vmul.f32 %v56, %v2122
    %v2197 = vmul.f32 %v57, %v2123
    %v2198 = vmul.f32 %v58, %v2123
    %v2199 = vmul.f32 %v59, %v2124
    %v2200 = vmul.f32 %v60, %v2124
    %v2201 = vmul.f32 %v61, %v2125
    %v2202 = vmul.f32 %v62, %v2125
    %v2203 = vmul.f32 %v63, %v2126
    %v2204 = vmul.f32 %v64, %v2126
    %v2205 = vmul.f32 %v65, %v2127
    %v2206 = vmul.f32 %v66, %v2127
    %v2207 = vmul.f32 %v67, %v2128
    %v2208 = vmul.f32 %v68, %v2128
    %v2209 = vmul.f32 %v69, %v2129
    %v2210 = vmul.f32 %v70, %v2129
    %v2211 = vmul.f32 %v71, %v2130
    %v2212 = vmul.f32 %v72, %v2130
    %v2213 = vmul.f32 %v73, %v2131
    %v2214 = vmul.f32 %v74, %v2131
    %v2215 = vmul.f32 %v75, %v2132
    %v2216 = vmul.f32 %v76, %v2132
    %v2217 = vmul.f32 %v77, %v2133
    %v2218 = vmul.f32 %v78, %v2133
    %v2219 = vmul.f32 %v79, %v2134
    %v2220 = vmul.f32 %v80, %v2134
    %v2221 = vmul.f32 %v81, %v2135
    %v2222 = vmul.f32 %v82, %v2135
    %v2223 = vmul.f32 %v83, %v2136
    %v2224 = vmul.f32 %v84, %v2136
    %v2225 = vmul.f32 %v85, %v2137
    %v2226 = vmul.f32 %v86, %v2137
    %v2227 = vmul.f32 %v87, %v2138
    %v2228 = vmul.f32 %v88, %v2138
    %v2229 = vmul.f32 %v89, %v2139
    %v2230 = vmul.f32 %v90, %v2139
    %v2231 = vmul.f32 %v91, %v2140
    %v2232 = vmul.f32 %v92, %v2140
    %v2233 = vmul.f32 %v93, %v2141
    %v2234 = vmul.f32 %v94, %v2141
    %v2235 = vmul.f32 %v95, %v2142
    %v2236 = vmul.f32 %v96, %v2142
    %v2237 = vmul.f32 %v97, %v2143
    %v2238 = vmul.f32 %v98, %v2143
    %v2239 = vmul.f32 %v99, %v2144
    %v2240 = vmul.f32 %v100, %v2144
    %v2241 = vmul.f32 %v101, %v2145
    %v2242 = vmul.f32 %v102, %v2145
    %v2243 = vmul.f32 %v103, %v2146
    %v2244 = vmul.f32 %v104, %v2146
    %v2245 = vmul.f32 %v105, %v2147
    %v2246 = vmul.f32 %v106, %v2147
    %v2247 = vmul.f32 %v107, %v2148
    %v2248 = vmul.f32 %v108, %v2148
    %v2249 = vmul.f32 %v109, %v2149
    %v2250 = vmul.f32 %v110, %v2149
    %v2251 = vmul.f32 %v111, %v2150
    %v2252 = vmul.f32 %v112, %v2150
    %v2253 = vmul.f32 %v113, %v2151
    %v2254 = vmul.f32 %v114, %v2151
    %v2255 = vmul.f32 %v115, %v2152
    %v2256 = vmul.f32 %v116, %v2152
    %v2257 = vmul.f32 %v117, %v2153
    %v2258 = vmul.f32 %v118, %v2153
    %v2259 = vmul.f32 %v119, %v2154
    %v2260 = vmul.f32 %v120, %v2154
    %v2261 = vmul.f32 %v121, %v2155
    %v2262 = vmul.f32 %v122, %v2155
    %v2263 = vmul.f32 %v123, %v2156
    %v2264 = vmul.f32 %v124, %v2156
    %v2265 = vmul.f32 %v125, %v2157
    %v2266 = vmul.f32 %v126, %v2157
    %v2267 = vmul.f32 %v127, %v2158
    %v2268 = vmul.f32 %v128, %v2158
    %v2269 = vmul.f32 %v129, %v2159
    %v2270 = vmul.f32 %v130, %v2159
    %v2271 = vmul.f32 %v131, %v2160
    %v2272 = vmul.f32 %v132, %v2160
    %v2273 = vmul.f32 %v133, %v2161
    %v2274 = vmul.f32 %v134, %v2161
    %v2275 = vmul.f32 %v135, %v2162
    %v2276 = vmul.f32 %v136, %v2162
    %v2277 = vmul.f32 %v137, %v2163
    %v2278 = vmul.f32 %v138, %v2163
    %v2279 = vmul.f32 %v139, %v2164
    %v2280 = vmul.f32 %v140, %v2164
    %v2281 = vmul.f32 %v141, %v2165
    %v2282 = vmul.f32 %v142, %v2165
    %v2283 = vmul.f32 %v143, %v2166
    %v2284 = vmul.f32 %v144, %v2166
    %v2285 = vmul.f32 %v145, %v2167
    %v2286 = vmul.f32 %v146, %v2167
    %v2287 = vmul.f32 %v147, %v2168
    %v2288 = vmul.f32 %v148, %v2168
    %v2289 = vmul.f32 %v149, %v2169
    %v2290 = vmul.f32 %v150, %v2169
    %v2291 = vmul.f32 %v151, %v2170
    %v2292 = vmul.f32 %v152, %v2170
    %v2293 = vmul.f32 %v153, %v2171
    %v2294 = vmul.f32 %v154, %v2171
    %v2295 = vmul.f32 %v155, %v2172
    %v2296 = vmul.f32 %v156, %v2172
    %v2297 = vmul.f32 %v157, %v2173
    %v2298 = vmul.f32 %v158, %v2173
    %v2299 = vmul.f32 %v159, %v2174
    %v2300 = vmul.f32 %v160, %v2174
    %2301 = vst [vmem:[#allocation7] sm:$0xff] %v2175
    %2302 = vst [vmem:[#allocation7 + $0x8] sm:$0xff] %v2176
    %2303 = vst [vmem:[#allocation7 + $0x10] sm:$0xff] %v2177
    %2304 = vst [vmem:[#allocation7 + $0x18] sm:$0xff] %v2178
    %2305 = vst [vmem:[#allocation7 + $0x20] sm:$0xff] %v2179
    %2306 = vst [vmem:[#allocation7 + $0x28] sm:$0xff] %v2180
    %2307 = vst [vmem:[#allocation7 + $0x30] sm:$0xff] %v2181
    %2308 = vst [vmem:[#allocation7 + $0x38] sm:$0xff] %v2182
    %2309 = vst [vmem:[#allocation7 + $0x40] sm:$0xff] %v2183
    %2310 = vst [vmem:[#allocation7 + $0x48] sm:$0xff] %v2184
    %2311 = vst [vmem:[#allocation7 + $0x50] sm:$0xff] %v2185
    %2312 = vst [vmem:[#allocation7 + $0x58] sm:$0xff] %v2186
    %2313 = vst [vmem:[#allocation7 + $0x60] sm:$0xff] %v2187
    %2314 = vst [vmem:[#allocation7 + $0x68] sm:$0xff] %v2188
    %2315 = vst [vmem:[#allocation7 + $0x70] sm:$0xff] %v2189
    %2316 = vst [vmem:[#allocation7 + $0x78] sm:$0xff] %v2190
    %2317 = vst [vmem:[#allocation7 + $0x80] sm:$0xff] %v2191
    %2318 = vst [vmem:[#allocation7 + $0x88] sm:$0xff] %v2192
    %2319 = vst [vmem:[#allocation7 + $0x90] sm:$0xff] %v2193
    %2320 = vst [vmem:[#allocation7 + $0x98] sm:$0xff] %v2194
    %2321 = vst [vmem:[#allocation7 + $0xa0] sm:$0xff] %v2195
    %2322 = vst [vmem:[#allocation7 + $0xa8] sm:$0xff] %v2196
    %2323 = vst [vmem:[#allocation7 + $0xb0] sm:$0xff] %v2197
    %2324 = vst [vmem:[#allocation7 + $0xb8] sm:$0xff] %v2198
    %2325 = vst [vmem:[#allocation7 + $0xc0] sm:$0xff] %v2199
    %2326 = vst [vmem:[#allocation7 + $0xc8] sm:$0xff] %v2200
    %2327 = vst [vmem:[#allocation7 + $0xd0] sm:$0xff] %v2201
    %2328 = vst [vmem:[#allocation7 + $0xd8] sm:$0xff] %v2202
    %2329 = vst [vmem:[#allocation7 + $0xe0] sm:$0xff] %v2203
    %2330 = vst [vmem:[#allocation7 + $0xe8] sm:$0xff] %v2204
    %2331 = vst [vmem:[#allocation7 + $0xf0] sm:$0xff] %v2205
    %2332 = vst [vmem:[#allocation7 + $0xf8] sm:$0xff] %v2206
    %2333 = vst [vmem:[#allocation7 + $0x100] sm:$0xff] %v2207
    %2334 = vst [vmem:[#allocation7 + $0x108] sm:$0xff] %v2208
    %2335 = vst [vmem:[#allocation7 + $0x110] sm:$0xff] %v2209
    %2336 = vst [vmem:[#allocation7 + $0x118] sm:$0xff] %v2210
    %2337 = vst [vmem:[#allocation7 + $0x120] sm:$0xff] %v2211
    %2338 = vst [vmem:[#allocation7 + $0x128] sm:$0xff] %v2212
    %2339 = vst [vmem:[#allocation7 + $0x130] sm:$0xff] %v2213
    %2340 = vst [vmem:[#allocation7 + $0x138] sm:$0xff] %v2214
    %2341 = vst [vmem:[#allocation7 + $0x140] sm:$0xff] %v2215
    %2342 = vst [vmem:[#allocation7 + $0x148] sm:$0xff] %v2216
    %2343 = vst [vmem:[#allocation7 + $0x150] sm:$0xff] %v2217
    %2344 = vst [vmem:[#allocation7 + $0x158] sm:$0xff] %v2218
    %2345 = vst [vmem:[#allocation7 + $0x160] sm:$0xff] %v2219
    %2346 = vst [vmem:[#allocation7 + $0x168] sm:$0xff] %v2220
    %2347 = vst [vmem:[#allocation7 + $0x170] sm:$0xff] %v2221
    %2348 = vst [vmem:[#allocation7 + $0x178] sm:$0xff] %v2222
    %2349 = vst [vmem:[#allocation7 + $0x180] sm:$0xff] %v2223
    %2350 = vst [vmem:[#allocation7 + $0x188] sm:$0xff] %v2224
    %2351 = vst [vmem:[#allocation7 + $0x190] sm:$0xff] %v2225
    %2352 = vst [vmem:[#allocation7 + $0x198] sm:$0xff] %v2226
    %2353 = vst [vmem:[#allocation7 + $0x1a0] sm:$0xff] %v2227
    %2354 = vst [vmem:[#allocation7 + $0x1a8] sm:$0xff] %v2228
    %2355 = vst [vmem:[#allocation7 + $0x1b0] sm:$0xff] %v2229
    %2356 = vst [vmem:[#allocation7 + $0x1b8] sm:$0xff] %v2230
    %2357 = vst [vmem:[#allocation7 + $0x1c0] sm:$0xff] %v2231
    %2358 = vst [vmem:[#allocation7 + $0x1c8] sm:$0xff] %v2232
    %2359 = vst [vmem:[#allocation7 + $0x1d0] sm:$0xff] %v2233
    %2360 = vst [vmem:[#allocation7 + $0x1d8] sm:$0xff] %v2234
    %2361 = vst [vmem:[#allocation7 + $0x1e0] sm:$0xff] %v2235
    %2362 = vst [vmem:[#allocation7 + $0x1e8] sm:$0xff] %v2236
    %2363 = vst [vmem:[#allocation7 + $0x1f0] sm:$0xff] %v2237
    %2364 = vst [vmem:[#allocation7 + $0x1f8] sm:$0xff] %v2238
    %2365 = vst [vmem:[#allocation7 + $0x200] sm:$0xff] %v2239
    %2366 = vst [vmem:[#allocation7 + $0x208] sm:$0xff] %v2240
    %2367 = vst [vmem:[#allocation7 + $0x210] sm:$0xff] %v2241
    %2368 = vst [vmem:[#allocation7 + $0x218] sm:$0xff] %v2242
    %2369 = vst [vmem:[#allocation7 + $0x220] sm:$0xff] %v2243
    %2370 = vst [vmem:[#allocation7 + $0x228] sm:$0xff] %v2244
    %2371 = vst [vmem:[#allocation7 + $0x230] sm:$0xff] %v2245
    %2372 = vst [vmem:[#allocation7 + $0x238] sm:$0xff] %v2246
    %2373 = vst [vmem:[#allocation7 + $0x240] sm:$0xff] %v2247
    %2374 = vst [vmem:[#allocation7 + $0x248] sm:$0xff] %v2248
    %2375 = vst [vmem:[#allocation7 + $0x250] sm:$0xff] %v2249
    %2376 = vst [vmem:[#allocation7 + $0x258] sm:$0xff] %v2250
    %2377 = vst [vmem:[#allocation7 + $0x260] sm:$0xff] %v2251
    %2378 = vst [vmem:[#allocation7 + $0x268] sm:$0xff] %v2252
    %2379 = vst [vmem:[#allocation7 + $0x270] sm:$0xff] %v2253
    %2380 = vst [vmem:[#allocation7 + $0x278] sm:$0xff] %v2254
    %2381 = vst [vmem:[#allocation7 + $0x280] sm:$0xff] %v2255
    %2382 = vst [vmem:[#allocation7 + $0x288] sm:$0xff] %v2256
    %2383 = vst [vmem:[#allocation7 + $0x290] sm:$0xff] %v2257
    %2384 = vst [vmem:[#allocation7 + $0x298] sm:$0xff] %v2258
    %2385 = vst [vmem:[#allocation7 + $0x2a0] sm:$0xff] %v2259
    %2386 = vst [vmem:[#allocation7 + $0x2a8] sm:$0xff] %v2260
    %2387 = vst [vmem:[#allocation7 + $0x2b0] sm:$0xff] %v2261
    %2388 = vst [vmem:[#allocation7 + $0x2b8] sm:$0xff] %v2262
    %2389 = vst [vmem:[#allocation7 + $0x2c0] sm:$0xff] %v2263
    %2390 = vst [vmem:[#allocation7 + $0x2c8] sm:$0xff] %v2264
    %2391 = vst [vmem:[#allocation7 + $0x2d0] sm:$0xff] %v2265
    %2392 = vst [vmem:[#allocation7 + $0x2d8] sm:$0xff] %v2266
    %2393 = vst [vmem:[#allocation7 + $0x2e0] sm:$0xff] %v2267
    %2394 = vst [vmem:[#allocation7 + $0x2e8] sm:$0xff] %v2268
    %2395 = vst [vmem:[#allocation7 + $0x2f0] sm:$0xff] %v2269
    %2396 = vst [vmem:[#allocation7 + $0x2f8] sm:$0xff] %v2270
    %2397 = vst [vmem:[#allocation7 + $0x300] sm:$0xff] %v2271
    %2398 = vst [vmem:[#allocation7 + $0x308] sm:$0xff] %v2272
    %2399 = vst [vmem:[#allocation7 + $0x310] sm:$0xff] %v2273
    %2400 = vst [vmem:[#allocation7 + $0x318] sm:$0xff] %v2274
    %2401 = vst [vmem:[#allocation7 + $0x320] sm:$0xff] %v2275
    %2402 = vst [vmem:[#allocation7 + $0x328] sm:$0xff] %v2276
    %2403 = vst [vmem:[#allocation7 + $0x330] sm:$0xff] %v2277
    %2404 = vst [vmem:[#allocation7 + $0x338] sm:$0xff] %v2278
    %2405 = vst [vmem:[#allocation7 + $0x340] sm:$0xff] %v2279
    %2406 = vst [vmem:[#allocation7 + $0x348] sm:$0xff] %v2280
    %2407 = vst [vmem:[#allocation7 + $0x350] sm:$0xff] %v2281
    %2408 = vst [vmem:[#allocation7 + $0x358] sm:$0xff] %v2282
    %2409 = vst [vmem:[#allocation7 + $0x360] sm:$0xff] %v2283
    %2410 = vst [vmem:[#allocation7 + $0x368] sm:$0xff] %v2284
    %2411 = vst [vmem:[#allocation7 + $0x370] sm:$0xff] %v2285
    %2412 = vst [vmem:[#allocation7 + $0x378] sm:$0xff] %v2286
    %2413 = vst [vmem:[#allocation7 + $0x380] sm:$0xff] %v2287
    %2414 = vst [vmem:[#allocation7 + $0x388] sm:$0xff] %v2288
    %2415 = vst [vmem:[#allocation7 + $0x390] sm:$0xff] %v2289
    %2416 = vst [vmem:[#allocation7 + $0x398] sm:$0xff] %v2290
    %2417 = vst [vmem:[#allocation7 + $0x3a0] sm:$0xff] %v2291
    %2418 = vst [vmem:[#allocation7 + $0x3a8] sm:$0xff] %v2292
    %2419 = vst [vmem:[#allocation7 + $0x3b0] sm:$0xff] %v2293
    %2420 = vst [vmem:[#allocation7 + $0x3b8] sm:$0xff] %v2294
    %2421 = vst [vmem:[#allocation7 + $0x3c0] sm:$0xff] %v2295
    %2422 = vst [vmem:[#allocation7 + $0x3c8] sm:$0xff] %v2296
    %2423 = vst [vmem:[#allocation7 + $0x3d0] sm:$0xff] %v2297
    %2424 = vst [vmem:[#allocation7 + $0x3d8] sm:$0xff] %v2298
    %2425 = vst [vmem:[#allocation7 + $0x3e0] sm:$0xff] %v2299
    %2426 = vst [vmem:[#allocation7 + $0x3e8] sm:$0xff] %v2300
    // Predicated region
    $region18: #{tpu_custom_call.1} parent=1 // pred_check
      _
    $region19: #{tpu_custom_call.1} parent=1 // pred_check_branch
      %2428 = sbr.rel (0) target = $region21
    $region20: #{tpu_custom_call.1} parent=1 // pred_region
      %s2430 = ssub.s32 16128, 16128
      %2431 = vsyncadd [#allocation6], %s2430
      %s2432 = sshll.u32 [#allocation7], 4
      %s2433 = int_to_ptr.vmem [resolvable:$true] %s2432
      %2438 = dma.vmem_to_hbm [thread:$0]  %s2433, 16128, %s4, [#allocation6], 256, 256, 16
    $region21: #{tpu_custom_call.1} parent=1 // pred_fallthru
      _
    // Predicated region
    $region22: #{tpu_custom_call.1} parent=1 // pred_check
      _
    $region23: #{tpu_custom_call.1} parent=1 // pred_check_branch
      %2440 = sbr.rel (0) target = $region25
    $region24: #{tpu_custom_call.1} parent=1 // pred_region
      _
    $region25: #{tpu_custom_call.1} parent=1 // pred_fallthru
      _
    // Predicated region
    $region26: #{tpu_custom_call.1} parent=1 // pred_check
      _
    $region27: #{tpu_custom_call.1} parent=1 // pred_check_branch
      %2442 = sbr.rel (0) target = $region29
    $region28: #{tpu_custom_call.1} parent=1 // pred_region
      _
    $region29: #{tpu_custom_call.1} parent=1 // pred_fallthru
      _
    // Predicated region
    $region30: #{tpu_custom_call.1} parent=1 // pred_check
      _
    $region31: #{tpu_custom_call.1} parent=1 // pred_check_branch
      %2444 = sbr.rel (0) target = $region33
    $region32: #{tpu_custom_call.1} parent=1 // pred_region
      %2445 = dma.done [#allocation6], 16128
    $region33: #{tpu_custom_call.1} parent=1 // pred_fallthru
      _
    // Predicated region
    $region34: #{tpu_custom_call.1} parent=1 // pred_check
      _
    $region35: #{tpu_custom_call.1} parent=1 // pred_check_branch
      %2447 = sbr.rel (0) target = $region37
    $region36: #{tpu_custom_call.1} parent=1 // pred_region
      _
    $region37: #{tpu_custom_call.1} parent=1 // pred_fallthru
      _
    // Predicated region
    $region38: #{tpu_custom_call.1} parent=1 // pred_check
      _
    $region39: #{tpu_custom_call.1} parent=1 // pred_check_branch
      %2449 = sbr.rel (0) target = $region41
    $region40: #{tpu_custom_call.1} parent=1 // pred_region
      _
    $region41: #{tpu_custom_call.1} parent=1 // pred_fallthru
      _
    %2450 = vsyncpa [#allocation5], 1
    %2451 = vsyncpa [#allocation6], 1

</llo_original>
